<compile_context>
chip_gen: v6e
topology: v6e:2x2x1
jax: 0.10.0
libtpu: 0.0.40
codegen_flags: <defaults>
</compile_context>

<pallas_src>
import functools

import jax
import jax.numpy as jnp
from jax.experimental import pallas as pl
from jax.experimental.pallas import tpu as pltpu


# ---------------------------------------------------------------------------
# Kernel 1: packed 1x1 Q/K/V projection (single channel matmul per tile).
# ---------------------------------------------------------------------------
def qkv_proj_kernel(w_ref, b_ref, x_ref, qkv_ref):
    # One MXU pass produces q||k||v rows for this spatial tile (sublane-dense
    # packed store instead of three tiny-M matmuls + masked partial stores).
    y = jax.lax.dot_general(
        w_ref[...], x_ref[0],
        dimension_numbers=(((1,), (0,)), ((), ())),
        preferred_element_type=jnp.float32)          # (Ct, TN) f32
    qkv_ref[0] = (y + b_ref[...]).astype(qkv_ref.dtype)


# ---------------------------------------------------------------------------
# Kernel 2: spatial attention (online softmax over resident K/V) fused with
#           project_out (1x1 conv) and the gamma residual epilogue.
# ---------------------------------------------------------------------------
def sab_attn_kernel(gamma_ref, q_ref, k_ref, v_ref, x_ref, wp_ref, bp_ref,
                    o_ref, acc_ref, m_ref, l_ref, *, tk, matmul_dtype):
    ki = pl.program_id(2)
    nk = pl.num_programs(2)

    @pl.when(ki == 0)
    def _init():
        m_ref[...] = jnp.full_like(m_ref, -jnp.inf)
        l_ref[...] = jnp.zeros_like(l_ref)
        acc_ref[...] = jnp.zeros_like(acc_ref)

    q = q_ref[0]                                     # (C8, TQ), resident over ki
    # K/V blocks hold the full spatial extent for this batch (resident in
    # VMEM); slice the current k tile with an aligned dynamic window.
    start = pl.multiple_of(ki * tk, tk)
    k = k_ref[0, :, pl.ds(start, tk)]                # (C8, TK)
    v = v_ref[0, :, pl.ds(start, tk)]                # (C,  TK)

    # Energy block, stored transposed: s_t[j, i] = sum_c k[c, j] * q[c, i].
    # Contracting-dim dot_general -> no explicit transposes; running softmax
    # stats come out as lane-dense (1, TQ) rows.
    s_t = jax.lax.dot_general(
        k, q, dimension_numbers=(((0,), (0,)), ((), ())),
        preferred_element_type=jnp.float32)          # (TK, TQ) f32

    m_prev = m_ref[...]                              # (1, TQ)
    m_new = jnp.maximum(m_prev, jnp.max(s_t, axis=0, keepdims=True))
    alpha = jnp.exp(m_prev - m_new)                  # (1, TQ) f32
    p_t = jnp.exp(s_t - m_new)                       # (TK, TQ) f32 (EUP)
    # TODO(synk): on v6e/v7x a further win is computing exp in bf16; kept f32
    #             here so the running l stats stay accurate on all generations.

    l_ref[...] = alpha * l_ref[...] + jnp.sum(p_t, axis=0, keepdims=True)
    # acc[c, i] += sum_j v[c, j] * p_t[j, i]  (== V @ attention^T, unnormalized).
    # Dominant matmul: bf16 operands, f32 MXU accumulation (~3x MXU throughput
    # vs f32 operands; accuracy tradeoff documented in the test tolerance).
    acc_ref[...] = alpha * acc_ref[...] + jax.lax.dot_general(
        v.astype(matmul_dtype), p_t.astype(matmul_dtype),
        dimension_numbers=(((1,), (0,)), ((), ())),
        preferred_element_type=jnp.float32)          # (C, TQ) f32
    m_ref[...] = m_new

    @pl.when(ki == nk - 1)
    def _finalize():
        # Exact reciprocal: runs once per output tile, negligible cost.
        inv_l = pl.reciprocal(l_ref[...], approx=False)
        out_t = acc_ref[...] * inv_l                 # (C, TQ) f32
        # project_out: 1x1 conv == Wp @ out + bp, fused into the epilogue.
        y = jax.lax.dot_general(
            wp_ref[...], out_t.astype(wp_ref.dtype),
            dimension_numbers=(((1,), (0,)), ((), ())),
            preferred_element_type=jnp.float32) + bp_ref[...]
        gamma = gamma_ref[0]
        o_ref[0] = (gamma * y + x_ref[0].astype(jnp.float32)).astype(o_ref.dtype)


# ---------------------------------------------------------------------------
# Helpers / wrapper
# ---------------------------------------------------------------------------
def _pick_proj_tile(hw):
    """Wide tiles for the mem-bound projection kernel (amortize step overhead)."""
    for t in (2048, 1024, 512, 256, 128):
        if hw % t == 0:
            return t
    return hw  # full extent is always a legal last-dim block


def _pick_attn_tile(hw, candidates=(256, 128, 64)):
    """Largest candidate dividing hw with >= 2 tiles; else any divisor; else hw.

    Per-generation tuning (pass tq/tk to sab_forward explicitly to override):
      v5e      : keep 128 (single vst slot, f32-only VPU/EUP).
      v6e/v7x  : tk can be widened to 256-512; keep tq at 128-256.
    """
    for t in candidates:
        if hw % t == 0 and hw // t >= 2:
            return t
    for t in candidates:
        if hw % t == 0:
            return t
    # TODO(synk): for large spatial sizes with no 64/128 divisor, pad HW to a
    #             multiple of 128 and mask padded keys instead of this fallback.
    return hw


def _depthwise3x3(x, w, b):
    """3x3 depthwise conv, padding=1, in the native dtype of x.
    x: (B, Cg, H, W); w: (Cg, 1, 3, 3); b: (Cg,)."""
    cg = x.shape[1]
    y = jax.lax.conv_general_dilated(
        x, w.astype(x.dtype),
        window_strides=(1, 1), padding=((1, 1), (1, 1)),
        dimension_numbers=("NCHW", "OIHW", "NCHW"),
        feature_group_count=cg)
    return y + b.astype(x.dtype)[None, :, None, None]


def sab_forward(x, params, *, matmul_dtype=jnp.bfloat16, tq=None, tk=None):
    """x: (B, C, H, W); params: dict of SAB weights (see __main__)."""
    B, C, H, W = x.shape
    HW = H * W
    dtype = x.dtype
    C8 = params["wq"].shape[0]
    Ct = 2 * C8 + C

    x_flat = x.reshape(B, C, HW)

    # ---- packed 1x1 Q/K/V projection (single matmul per tile) --------------
    w_pack = jnp.concatenate(
        [params["wq"], params["wk"], params["wv"]], axis=0).astype(dtype)
    b_pack = jnp.concatenate(
        [params["bq"], params["bk"], params["bv"]], axis=0
    ).reshape(Ct, 1).astype(jnp.float32)

    tn = _pick_proj_tile(HW)
    qkv = pl.pallas_call(
        qkv_proj_kernel,
        out_shape=jax.ShapeDtypeStruct((B, Ct, HW), dtype),
        grid_spec=pltpu.PrefetchScalarGridSpec(
            num_scalar_prefetch=0,
            grid=(B, HW // tn),
            in_specs=[
                pl.BlockSpec((Ct, C), lambda b, n: (0, 0)),
                pl.BlockSpec((Ct, 1), lambda b, n: (0, 0)),
                pl.BlockSpec((1, C, tn), lambda b, n: (b, 0, n)),
            ],
            out_specs=pl.BlockSpec((1, Ct, tn), lambda b, n: (b, 0, n)),
        ),
        compiler_params=pltpu.CompilerParams(
            dimension_semantics=("parallel", "parallel")),
    )(w_pack, b_pack, x_flat)

    # ---- one packed 3x3 depthwise conv over all q||k||v channels -----------
    w_dw = jnp.concatenate(
        [params["w_qk_dw"], params["w_qk_dw"], params["w_v_dw"]], axis=0)
    b_dw = jnp.concatenate(
        [params["b_qk_dw"], params["b_qk_dw"], params["b_v_dw"]], axis=0)
    qkv_dw = _depthwise3x3(qkv.reshape(B, Ct, H, W), w_dw, b_dw)
    qkv_dw = qkv_dw.reshape(B, Ct, HW).astype(dtype)
    q = qkv_dw[:, :C8]
    k = qkv_dw[:, C8:2 * C8]
    v = qkv_dw[:, 2 * C8:]

    # ---- fused spatial attention + project_out + gamma residual ------------
    if tq is None:
        tq = _pick_attn_tile(HW)
    if tk is None:
        tk = _pick_attn_tile(HW)
    nq, nk = HW // tq, HW // tk

    # K/V residency per batch costs (C8 + C) * HW * itemsize * 2 (double
    # buffer) of VMEM; tiny at these channel counts even on v7x (64 MiB).
    # Raise vmem_limit_bytes in CompilerParams if scaling HW far beyond 64k.
    kernel = functools.partial(sab_attn_kernel, tk=tk, matmul_dtype=matmul_dtype)
    out_flat = pl.pallas_call(
        kernel,
        out_shape=jax.ShapeDtypeStruct((B, C, HW), dtype),
        grid_spec=pltpu.PrefetchScalarGridSpec(
            num_scalar_prefetch=0,
            grid=(B, nq, nk),
            in_specs=[
                pl.BlockSpec(memory_space=pltpu.MemorySpace.SMEM),        # gamma
                pl.BlockSpec((1, C8, tq), lambda b, qi, ki: (b, 0, qi)),  # q tile (resident over ki)
                pl.BlockSpec((1, C8, HW), lambda b, qi, ki: (b, 0, 0)),   # K fully resident per batch
                pl.BlockSpec((1, C, HW), lambda b, qi, ki: (b, 0, 0)),    # V fully resident per batch
                pl.BlockSpec((1, C, tq), lambda b, qi, ki: (b, 0, qi)),   # x residual
                pl.BlockSpec((C, C), lambda b, qi, ki: (0, 0)),           # Wp
                pl.BlockSpec((C, 1), lambda b, qi, ki: (0, 0)),           # bp
            ],
            out_specs=pl.BlockSpec((1, C, tq), lambda b, qi, ki: (b, 0, qi)),
            scratch_shapes=[
                pltpu.VMEM((C, tq), jnp.float32),   # acc
                pltpu.VMEM((1, tq), jnp.float32),   # running max
                pltpu.VMEM((1, tq), jnp.float32),   # running sum
            ],
        ),
        compiler_params=pltpu.CompilerParams(
            dimension_semantics=("parallel", "parallel", "arbitrary")),
    )(params["gamma"].astype(jnp.float32), q, k, v, x_flat,
      params["wp"].astype(dtype),
      params["bp"].reshape(C, 1).astype(jnp.float32))

    return out_flat.reshape(B, C, H, W)


# ---------------------------------------------------------------------------
# Pure-JAX f32 reference matching the PyTorch forward.
# ---------------------------------------------------------------------------
def sab_reference(x, params):
    B, C, H, W = x.shape
    HW = H * W
    xf = x.astype(jnp.float32)

    def conv1x1(t, w, b):
        return jnp.einsum("oi,bihw->bohw", w, t) + b[None, :, None, None]

    q = _depthwise3x3(conv1x1(xf, params["wq"], params["bq"]),
                      params["w_qk_dw"], params["b_qk_dw"])
    k = _depthwise3x3(conv1x1(xf, params["wk"], params["bk"]),
                      params["w_qk_dw"], params["b_qk_dw"])
    v = _depthwise3x3(conv1x1(xf, params["wv"], params["bv"]),
                      params["w_v_dw"], params["b_v_dw"])

    qf = q.reshape(B, -1, HW)
    kf = k.reshape(B, -1, HW)
    vf = v.reshape(B, C, HW)

    energy = jnp.einsum("bci,bcj->bij", qf, kf)          # (B, HW, HW)
    attention = jax.nn.softmax(energy, axis=-1)
    out = jnp.einsum("bcj,bij->bci", vf, attention)      # V @ A^T
    out = out.reshape(B, C, H, W)
    out = conv1x1(out, params["wp"], params["bp"])
    return (params["gamma"][0] * out + xf).astype(x.dtype)


if __name__ == "__main__":
    B, C, H, W = 2, 16, 16, 16           # in_dim must be divisible by 8
    C8 = C // 8

    key = jax.random.PRNGKey(0)
    keys = jax.random.split(key, 13)

    def nrm(k, shape, scale):
        return (scale * jax.random.normal(k, shape)).astype(jnp.float32)

    params = dict(
        wq=nrm(keys[0], (C8, C), C ** -0.5),  bq=nrm(keys[1], (C8,), 0.1),
        wk=nrm(keys[2], (C8, C), C ** -0.5),  bk=nrm(keys[3], (C8,), 0.1),
        wv=nrm(keys[4], (C, C), C ** -0.5),   bv=nrm(keys[5], (C,), 0.1),
        w_qk_dw=nrm(keys[6], (C8, 1, 3, 3), 1.0 / 3.0),
        b_qk_dw=nrm(keys[7], (C8,), 0.1),
        w_v_dw=nrm(keys[8], (C, 1, 3, 3), 1.0 / 3.0),
        b_v_dw=nrm(keys[9], (C,), 0.1),
        wp=nrm(keys[10], (C, C), C ** -0.5),  bp=nrm(keys[11], (C,), 0.1),
        # nn.Parameter(torch.zeros(1)) inits gamma to 0; use a nonzero value so
        # the attention / project_out path is actually exercised.
        gamma=jnp.array([0.5], dtype=jnp.float32),
    )
    x = jax.random.normal(keys[12], (B, C, H, W), dtype=jnp.float32)

    y = jax.jit(sab_forward)(x, params)
    jax.block_until_ready(y)

    y_ref = sab_reference(x, params)
    assert y.shape == (B, C, H, W)
    # tolerance covers the bf16-operand V·P MXU matmul (f32 accumulation)
    assert jnp.allclose(y, y_ref, atol=1e-2, rtol=1e-2), "mismatch vs reference"

    print("KERNEL_OK")
</pallas_src>

<mosaic_0001>
module attributes {stable_mosaic.version = 11 : i64} {
  func.func @qkv_proj_kernel(%arg0: i32, %arg1: i32, %arg2: memref<20x16xf32, #tpu.memory_space<vmem>>, %arg3: memref<20x1xf32, #tpu.memory_space<vmem>>, %arg4: memref<1x16x256xf32, #tpu.memory_space<vmem>>, %arg5: memref<1x20x256xf32, #tpu.memory_space<vmem>>) attributes {dimension_semantics = [#tpu.dimension_semantics<parallel>, #tpu.dimension_semantics<parallel>], iteration_bounds = array<i64: 2, 1>, scalar_prefetch = 0 : i64, scratch_operands = 0 : i64, tpu.core_type = #tpu.core_type<tc>, window_params = [{pipeline_mode = #tpu.pipeline_mode<synchronous>, transform_indices = @transform_0, window_bounds = array<i64: 20, 16>}, {pipeline_mode = #tpu.pipeline_mode<synchronous>, transform_indices = @transform_1, window_bounds = array<i64: 20, 1>}, {transform_indices = @transform_2, window_bounds = array<i64: 1, 16, 256>}, {transform_indices = @transform_3, window_bounds = array<i64: 1, 20, 256>}]} {
    %c0 = arith.constant 0 : index
    %c0_0 = arith.constant 0 : index
    %0 = vector.load %arg2[%c0, %c0_0] : memref<20x16xf32, #tpu.memory_space<vmem>>, vector<20x16xf32>
    %c0_1 = arith.constant 0 : index
    %c0_2 = arith.constant 0 : index
    %c0_3 = arith.constant 0 : index
    %1 = vector.load %arg4[%c0_1, %c0_2, %c0_3] : memref<1x16x256xf32, #tpu.memory_space<vmem>>, vector<1x16x256xf32>
    %2 = vector.shape_cast %1 : vector<1x16x256xf32> to vector<16x256xf32>
    %cst = arith.constant dense<0.000000e+00> : vector<20x256xf32>
    %3 = tpu.matmul %0, %2, %cst {dimension_numbers = #tpu.dot_dimension_numbers<[1], [0], [0], [1], [0, 0, 1, 1], [], []>} : vector<20x16xf32>, vector<16x256xf32>, vector<20x256xf32> -> vector<20x256xf32>
    %c0_4 = arith.constant 0 : index
    %c0_5 = arith.constant 0 : index
    %4 = vector.load %arg3[%c0_4, %c0_5] : memref<20x1xf32, #tpu.memory_space<vmem>>, vector<20x1xf32>
    %5 = vector.broadcast %4 : vector<20x1xf32> to vector<20x256xf32>
    %6 = arith.addf %3, %5 : vector<20x256xf32>
    %c0_6 = arith.constant 0 : index
    %c0_7 = arith.constant 0 : index
    %c0_8 = arith.constant 0 : index
    %7 = vector.load %arg5[%c0_6, %c0_7, %c0_8] : memref<1x20x256xf32, #tpu.memory_space<vmem>>, vector<1x20x256xf32>
    %8 = vector.shape_cast %7 : vector<1x20x256xf32> to vector<20x256xf32>
    %9 = vector.shape_cast %6 : vector<20x256xf32> to vector<1x20x256xf32>
    tpu.vector_store %arg5[%c0_6, %c0_7, %c0_8], %9 {strides = array<i32>} : memref<1x20x256xf32, #tpu.memory_space<vmem>>, vector<1x20x256xf32>,
    return
  }
  func.func @transform_0(%arg0: i32, %arg1: i32) -> (i32, i32) {
    %c0_i32 = arith.constant 0 : i32
    %c0_i32_0 = arith.constant 0 : i32
    %c0_i32_1 = arith.constant 0 : i32
    return %c0_i32, %c0_i32_0 : i32, i32
  }
  func.func @transform_1(%arg0: i32, %arg1: i32) -> (i32, i32) {
    %c0_i32 = arith.constant 0 : i32
    %c0_i32_0 = arith.constant 0 : i32
    %c0_i32_1 = arith.constant 0 : i32
    return %c0_i32, %c0_i32_0 : i32, i32
  }
  func.func @transform_2(%arg0: i32, %arg1: i32) -> (i32, i32, i32) {
    %c0_i32 = arith.constant 0 : i32
    %c0_i32_0 = arith.constant 0 : i32
    return %arg0, %c0_i32, %arg1 : i32, i32, i32
  }
  func.func @transform_3(%arg0: i32, %arg1: i32) -> (i32, i32, i32) {
    %c0_i32 = arith.constant 0 : i32
    %c0_i32_0 = arith.constant 0 : i32
    return %arg0, %c0_i32, %arg1 : i32, i32, i32
  }
}

module attributes {stable_mosaic.version = 11 : i64} {
  func.func @sab_attn_kernel(%arg0: i32, %arg1: i32, %arg2: i32, %arg3: memref<1xf32, #tpu.memory_space<smem>>, %arg4: memref<1x2x128xf32, #tpu.memory_space<vmem>>, %arg5: memref<1x2x256xf32, #tpu.memory_space<vmem>>, %arg6: memref<1x16x256xf32, #tpu.memory_space<vmem>>, %arg7: memref<1x16x128xf32, #tpu.memory_space<vmem>>, %arg8: memref<16x16xf32, #tpu.memory_space<vmem>>, %arg9: memref<16x1xf32, #tpu.memory_space<vmem>>, %arg10: memref<1x16x128xf32, #tpu.memory_space<vmem>>, %arg11: memref<16x128xf32, #tpu.memory_space<vmem>>, %arg12: memref<1x128xf32, #tpu.memory_space<vmem>>, %arg13: memref<1x128xf32, #tpu.memory_space<vmem>>) attributes {dimension_semantics = [#tpu.dimension_semantics<parallel>, #tpu.dimension_semantics<parallel>, #tpu.dimension_semantics<arbitrary>], iteration_bounds = array<i64: 2, 2, 2>, scalar_prefetch = 0 : i64, scratch_operands = 3 : i64, tpu.core_type = #tpu.core_type<tc>, window_params = [{transform_indices = @transform_0, window_bounds = array<i64: 1>}, {transform_indices = @transform_1, window_bounds = array<i64: 1, 2, 128>}, {transform_indices = @transform_2, window_bounds = array<i64: 1, 2, 256>}, {transform_indices = @transform_3, window_bounds = array<i64: 1, 16, 256>}, {transform_indices = @transform_4, window_bounds = array<i64: 1, 16, 128>}, {pipeline_mode = #tpu.pipeline_mode<synchronous>, transform_indices = @transform_5, window_bounds = array<i64: 16, 16>}, {pipeline_mode = #tpu.pipeline_mode<synchronous>, transform_indices = @transform_6, window_bounds = array<i64: 16, 1>}, {transform_indices = @transform_7, window_bounds = array<i64: 1, 16, 128>}]} {
    %c0_i32 = arith.constant 0 : i32
    %0 = arith.cmpi eq, %arg2, %c0_i32 : i32
    %1 = arith.extui %0 : i1 to i32
    %c0_i32_0 = arith.constant 0 : i32
    %2 = arith.cmpi ne, %1, %c0_i32_0 : i32
    scf.if %2 {
      %cst_23 = arith.constant 0xFF800000 : f32
      %41 = vector.broadcast %cst_23 : f32 to vector<1x128xf32>
      %c0_24 = arith.constant 0 : index
      %c0_25 = arith.constant 0 : index
      %42 = vector.load %arg12[%c0_24, %c0_25] : memref<1x128xf32, #tpu.memory_space<vmem>>, vector<1x128xf32>
      tpu.vector_store %arg12[%c0_24, %c0_25], %41 {strides = array<i32>} : memref<1x128xf32, #tpu.memory_space<vmem>>, vector<1x128xf32>,
      %cst_26 = arith.constant 0.000000e+00 : f32
      %43 = vector.broadcast %cst_26 : f32 to vector<1x128xf32>
      %c0_27 = arith.constant 0 : index
      %c0_28 = arith.constant 0 : index
      %44 = vector.load %arg13[%c0_27, %c0_28] : memref<1x128xf32, #tpu.memory_space<vmem>>, vector<1x128xf32>
      tpu.vector_store %arg13[%c0_27, %c0_28], %43 {strides = array<i32>} : memref<1x128xf32, #tpu.memory_space<vmem>>, vector<1x128xf32>,
      %cst_29 = arith.constant 0.000000e+00 : f32
      %45 = vector.broadcast %cst_29 : f32 to vector<16x128xf32>
      %c0_30 = arith.constant 0 : index
      %c0_31 = arith.constant 0 : index
      %46 = vector.load %arg11[%c0_30, %c0_31] : memref<16x128xf32, #tpu.memory_space<vmem>>, vector<16x128xf32>
      tpu.vector_store %arg11[%c0_30, %c0_31], %45 {strides = array<i32>} : memref<16x128xf32, #tpu.memory_space<vmem>>, vector<16x128xf32>,
    } else {
    }
    %c0 = arith.constant 0 : index
    %c0_1 = arith.constant 0 : index
    %c0_2 = arith.constant 0 : index
    %3 = vector.load %arg4[%c0, %c0_1, %c0_2] : memref<1x2x128xf32, #tpu.memory_space<vmem>>, vector<1x2x128xf32>
    %4 = vector.shape_cast %3 : vector<1x2x128xf32> to vector<2x128xf32>
    %c128_i32 = arith.constant 128 : i32
    %5 = arith.muli %arg2, %c128_i32 : i32
    %6 = tpu.assume_multiple %5, 128 : i32
    %c0_3 = arith.constant 0 : index
    %c0_4 = arith.constant 0 : index
    %7 = arith.index_cast %6 : i32 to index
    %8 = vector.load %arg5[%c0_3, %c0_4, %7] : memref<1x2x256xf32, #tpu.memory_space<vmem>>, vector<1x2x128xf32>
    %9 = vector.shape_cast %8 : vector<1x2x128xf32> to vector<2x128xf32>
    %c0_5 = arith.constant 0 : index
    %c0_6 = arith.constant 0 : index
    %10 = arith.index_cast %6 : i32 to index
    %11 = vector.load %arg6[%c0_5, %c0_6, %10] : memref<1x16x256xf32, #tpu.memory_space<vmem>>, vector<1x16x128xf32>
    %12 = vector.shape_cast %11 : vector<1x16x128xf32> to vector<16x128xf32>
    %cst = arith.constant dense<0.000000e+00> : vector<128x128xf32>
    %13 = tpu.matmul %9, %4, %cst {dimension_numbers = #tpu.dot_dimension_numbers<[0], [0], [1], [1], [0, 1, 1, 1], [], []>} : vector<2x128xf32>, vector<2x128xf32>, vector<128x128xf32> -> vector<128x128xf32>
    %c0_7 = arith.constant 0 : index
    %c0_8 = arith.constant 0 : index
    %14 = vector.load %arg12[%c0_7, %c0_8] : memref<1x128xf32, #tpu.memory_space<vmem>>, vector<1x128xf32>
    %cst_9 = arith.constant dense<0xFF800000> : vector<128xf32>
    %15 = vector.multi_reduction <maximumf>, %13, %cst_9 [0] : vector<128x128xf32> to vector<128xf32>
    %16 = vector.shape_cast %15 : vector<128xf32> to vector<1x128xf32>
    %17 = arith.maximumf %14, %16 : vector<1x128xf32>
    %18 = arith.subf %14, %17 : vector<1x128xf32>
    %19 = math.exp %18 : vector<1x128xf32>
    %20 = vector.broadcast %17 : vector<1x128xf32> to vector<128x128xf32>
    %21 = arith.subf %13, %20 : vector<128x128xf32>
    %22 = math.exp %21 : vector<128x128xf32>
    %c0_10 = arith.constant 0 : index
    %c0_11 = arith.constant 0 : index
    %23 = vector.load %arg13[%c0_10, %c0_11] : memref<1x128xf32, #tpu.memory_space<vmem>>, vector<1x128xf32>
    %24 = arith.mulf %19, %23 : vector<1x128xf32>
    %cst_12 = arith.constant dense<0.000000e+00> : vector<128xf32>
    %25 = vector.multi_reduction <add>, %22, %cst_12 [0] : vector<128x128xf32> to vector<128xf32>
    %26 = vector.shape_cast %25 : vector<128xf32> to vector<1x128xf32>
    %27 = arith.addf %24, %26 : vector<1x128xf32>
    %c0_13 = arith.constant 0 : index
    %c0_14 = arith.constant 0 : index
    %28 = vector.load %arg13[%c0_13, %c0_14] : memref<1x128xf32, #tpu.memory_space<vmem>>, vector<1x128xf32>
    tpu.vector_store %arg13[%c0_13, %c0_14], %27 {strides = array<i32>} : memref<1x128xf32, #tpu.memory_space<vmem>>, vector<1x128xf32>,
    %c0_15 = arith.constant 0 : index
    %c0_16 = arith.constant 0 : index
    %29 = vector.load %arg11[%c0_15, %c0_16] : memref<16x128xf32, #tpu.memory_space<vmem>>, vector<16x128xf32>
    %30 = vector.broadcast %19 : vector<1x128xf32> to vector<16x128xf32>
    %31 = arith.mulf %30, %29 : vector<16x128xf32>
    %32 = arith.truncf %12 : vector<16x128xf32> to vector<16x128xbf16>
    %33 = arith.truncf %22 : vector<128x128xf32> to vector<128x128xbf16>
    %cst_17 = arith.constant dense<0.000000e+00> : vector<16x128xf32>
    %34 = tpu.matmul %32, %33, %cst_17 {dimension_numbers = #tpu.dot_dimension_numbers<[1], [0], [0], [1], [0, 0, 1, 1], [], []>} : vector<16x128xbf16>, vector<128x128xbf16>, vector<16x128xf32> -> vector<16x128xf32>
    %35 = arith.addf %31, %34 : vector<16x128xf32>
    %c0_18 = arith.constant 0 : index
    %c0_19 = arith.constant 0 : index
    %36 = vector.load %arg11[%c0_18, %c0_19] : memref<16x128xf32, #tpu.memory_space<vmem>>, vector<16x128xf32>
    tpu.vector_store %arg11[%c0_18, %c0_19], %35 {strides = array<i32>} : memref<16x128xf32, #tpu.memory_space<vmem>>, vector<16x128xf32>,
    %c0_20 = arith.constant 0 : index
    %c0_21 = arith.constant 0 : index
    %37 = vector.load %arg12[%c0_20, %c0_21] : memref<1x128xf32, #tpu.memory_space<vmem>>, vector<1x128xf32>
    tpu.vector_store %arg12[%c0_20, %c0_21], %17 {strides = array<i32>} : memref<1x128xf32, #tpu.memory_space<vmem>>, vector<1x128xf32>,
    %c1_i32 = arith.constant 1 : i32
    %38 = arith.cmpi eq, %arg2, %c1_i32 : i32
    %39 = arith.extui %38 : i1 to i32
    %c0_i32_22 = arith.constant 0 : i32
    %40 = arith.cmpi ne, %39, %c0_i32_22 : i32
    scf.if %40 {
      %c0_23 = arith.constant 0 : index
      %c0_24 = arith.constant 0 : index
      %41 = vector.load %arg13[%c0_23, %c0_24] : memref<1x128xf32, #tpu.memory_space<vmem>>, vector<1x128xf32>
      %42 = tpu.reciprocal %41 : vector<1x128xf32> -> vector<1x128xf32>
      %c0_25 = arith.constant 0 : index
      %c0_26 = arith.constant 0 : index
      %43 = vector.load %arg11[%c0_25, %c0_26] : memref<16x128xf32, #tpu.memory_space<vmem>>, vector<16x128xf32>
      %44 = vector.broadcast %42 : vector<1x128xf32> to vector<16x128xf32>
      %45 = arith.mulf %43, %44 : vector<16x128xf32>
      %c0_27 = arith.constant 0 : index
      %c0_28 = arith.constant 0 : index
      %46 = vector.load %arg8[%c0_27, %c0_28] : memref<16x16xf32, #tpu.memory_space<vmem>>, vector<16x16xf32>
      %cst_29 = arith.constant dense<0.000000e+00> : vector<16x128xf32>
      %47 = tpu.matmul %46, %45, %cst_29 {dimension_numbers = #tpu.dot_dimension_numbers<[1], [0], [0], [1], [0, 0, 1, 1], [], []>} : vector<16x16xf32>, vector<16x128xf32>, vector<16x128xf32> -> vector<16x128xf32>
      %c0_30 = arith.constant 0 : index
      %c0_31 = arith.constant 0 : index
      %48 = vector.load %arg9[%c0_30, %c0_31] : memref<16x1xf32, #tpu.memory_space<vmem>>, vector<16x1xf32>
      %49 = vector.broadcast %48 : vector<16x1xf32> to vector<16x128xf32>
      %50 = arith.addf %47, %49 : vector<16x128xf32>
      %c0_32 = arith.constant 0 : index
      %51 = memref.load %arg3[%c0_32] : memref<1xf32, #tpu.memory_space<smem>>
      %52 = vector.broadcast %51 : f32 to vector<16x128xf32>
      %53 = arith.mulf %52, %50 : vector<16x128xf32>
      %c0_33 = arith.constant 0 : index
      %c0_34 = arith.constant 0 : index
      %c0_35 = arith.constant 0 : index
      %54 = vector.load %arg7[%c0_33, %c0_34, %c0_35] : memref<1x16x128xf32, #tpu.memory_space<vmem>>, vector<1x16x128xf32>
      %55 = vector.shape_cast %54 : vector<1x16x128xf32> to vector<16x128xf32>
      %56 = arith.addf %53, %55 : vector<16x128xf32>
      %c0_36 = arith.constant 0 : index
      %c0_37 = arith.constant 0 : index
      %c0_38 = arith.constant 0 : index
      %57 = vector.load %arg10[%c0_36, %c0_37, %c0_38] : memref<1x16x128xf32, #tpu.memory_space<vmem>>, vector<1x16x128xf32>
      %58 = vector.shape_cast %57 : vector<1x16x128xf32> to vector<16x128xf32>
      %59 = vector.shape_cast %56 : vector<16x128xf32> to vector<1x16x128xf32>
      tpu.vector_store %arg10[%c0_36, %c0_37, %c0_38], %59 {strides = array<i32>} : memref<1x16x128xf32, #tpu.memory_space<vmem>>, vector<1x16x128xf32>,
    } else {
    }
    return
  }
  func.func @transform_0(%arg0: i32, %arg1: i32, %arg2: i32) -> i32 {
    %c0_i32 = arith.constant 0 : i32
    %c0_i32_0 = arith.constant 0 : i32
    return %c0_i32 : i32
  }
  func.func @transform_1(%arg0: i32, %arg1: i32, %arg2: i32) -> (i32, i32, i32) {
    %c0_i32 = arith.constant 0 : i32
    %c0_i32_0 = arith.constant 0 : i32
    return %arg0, %c0_i32, %arg1 : i32, i32, i32
  }
  func.func @transform_2(%arg0: i32, %arg1: i32, %arg2: i32) -> (i32, i32, i32) {
    %c0_i32 = arith.constant 0 : i32
    %c0_i32_0 = arith.constant 0 : i32
    %c0_i32_1 = arith.constant 0 : i32
    return %arg0, %c0_i32, %c0_i32_0 : i32, i32, i32
  }
  func.func @transform_3(%arg0: i32, %arg1: i32, %arg2: i32) -> (i32, i32, i32) {
    %c0_i32 = arith.constant 0 : i32
    %c0_i32_0 = arith.constant 0 : i32
    %c0_i32_1 = arith.constant 0 : i32
    return %arg0, %c0_i32, %c0_i32_0 : i32, i32, i32
  }
  func.func @transform_4(%arg0: i32, %arg1: i32, %arg2: i32) -> (i32, i32, i32) {
    %c0_i32 = arith.constant 0 : i32
    %c0_i32_0 = arith.constant 0 : i32
    return %arg0, %c0_i32, %arg1 : i32, i32, i32
  }
  func.func @transform_5(%arg0: i32, %arg1: i32, %arg2: i32) -> (i32, i32) {
    %c0_i32 = arith.constant 0 : i32
    %c0_i32_0 = arith.constant 0 : i32
    %c0_i32_1 = arith.constant 0 : i32
    return %c0_i32, %c0_i32_0 : i32, i32
  }
  func.func @transform_6(%arg0: i32, %arg1: i32, %arg2: i32) -> (i32, i32) {
    %c0_i32 = arith.constant 0 : i32
    %c0_i32_0 = arith.constant 0 : i32
    %c0_i32_1 = arith.constant 0 : i32
    return %c0_i32, %c0_i32_0 : i32, i32
  }
  func.func @transform_7(%arg0: i32, %arg1: i32, %arg2: i32) -> (i32, i32, i32) {
    %c0_i32 = arith.constant 0 : i32
    %c0_i32_0 = arith.constant 0 : i32
    return %arg0, %c0_i32, %arg1 : i32, i32, i32
  }
}

</mosaic_0001>

<llo_original>
// kernel: sab_forward.2
$region0: #{sab_forward.2}
  #allocation0 [shape = 'u32[]', space=smem, size = 0x4, offset = 0x4, fixed_abs, tag = 'smem constant byte address 0x4 - core index']
  #allocation1 [shape = 'u32[144,128]{1,0:T(1,128)}', space=vmem, size = 0x12000, scoped, tag = 'internal scratch']
  %s0 = inlined_call_operand.vmem [shape: f32[20,16], index: 0, kind: input, shape index: {}]
  %s1 = inlined_call_operand.vmem [shape: f32[20,1], index: 1, kind: input, shape index: {}]
  %s2 = inlined_call_operand.vmem [shape: f32[2,16,256], index: 2, kind: input, shape index: {}]
  %s3 = inlined_call_operand.vmem [shape: f32[2,20,256], index: 3, kind: output, shape index: {}]
  %s4 = sld [smem:[#allocation0]]
  $region45: #{sab_forward.2} parent=0
    _
  %s6 = ssub.s32 1, %s4
  %s7 = scalar_select 0, %s6, %s4
  loop: start=0, step=1, limit=4
  $region2: #{sab_forward.2} parent=0 // loop_pre_header
    _
  $region3: #{sab_forward.2} parent=0 // loop_header
    %s9 = sphi 0, %s13
    %p10 = scmp.ge.s32.totalorder %s9, 4
    %s16 = sphi 0, %s28
    %s17 = sphi 0, %s24
    %s18 = sphi 0, %s16
    %s19 = sphi 0, %s17
    %s20 = sphi 0, %s18
    %s21 = sphi 0, %s19
    %s29 = sphi 0, %s29
    %s31 = sphi 0, %s29
    %s32 = sphi 0, %s31
    %s46 = sphi 0, %s32
    %s50 = sphi 0, %s50
    %s52 = sphi 0, %s50
    %s53 = sphi 0, %s52
    %s67 = sphi 0, %s53
    %s75 = sphi 0, %s77
    %s78 = sphi 0, %s75
    %s79 = sphi 0, %s78
    %s95 = sphi 0, %s79
    %s103 = sphi 0, %s105
    %s106 = sphi 0, %s103
    %s107 = sphi 0, %s106
    %s123 = sphi 0, %s107
  $region4: #{sab_forward.2} parent=0 // loop_header_branch
    %12 = sbr.rel (%p10) target = $region8
  $region5: #{sab_forward.2} parent=0 // loop_body
    %s14 = ssub.s32 %s9, 1
    %s15 = ssub.s32 %s9, 2
    %s22 = sadd.s32 1, %s17
    %p23 = scmp.ge.s32.totalorder %s22, 1
    %s24 = scalar_select %p23, 0, %s22
    %s25 = sadd.s32 1, %s16
    %s26 = scalar_select %p23, %s25, %s16
    %p27 = scmp.ge.s32.totalorder %s26, 2
    %s28 = scalar_select %p27, 0, %s26
    %s30 = sadd.s32 %s29, 1
    %p33 = scmp.eq.s32.totalorder %s9, 1
    %p34 = scmp.ne.s32.totalorder %s29, %s31
    %p35 = scmp.eq.s32.totalorder %s9, 0
    %p36 = por %p34, %p35
    %p37 = scmp.ne.s32.totalorder %s29, %s31
    %p38 = scmp.eq.s32.totalorder %s14, 1
    %p39 = por %p37, %p38
    %p40 = scmp.ne.s32.totalorder %s31, %s32
    %p41 = scmp.eq.s32.totalorder %s14, 0
    %p42 = por %p40, %p41
    %p43 = scmp.ne.s32.totalorder %s31, %s32
    %p44 = scmp.eq.s32.totalorder %s15, 1
    %p45 = por %p43, %p44
    %p47 = scmp.ne.s32.totalorder %s32, %s46
    %p48 = scmp.eq.s32.totalorder %s15, 0
    %p49 = por %p47, %p48
    %s51 = sadd.s32 %s50, 1
    %p54 = scmp.eq.s32.totalorder %s9, 1
    %p55 = scmp.ne.s32.totalorder %s50, %s52
    %p56 = scmp.eq.s32.totalorder %s9, 0
    %p57 = por %p55, %p56
    %p58 = scmp.ne.s32.totalorder %s50, %s52
    %p59 = scmp.eq.s32.totalorder %s14, 1
    %p60 = por %p58, %p59
    %p61 = scmp.ne.s32.totalorder %s52, %s53
    %p62 = scmp.eq.s32.totalorder %s14, 0
    %p63 = por %p61, %p62
    %p64 = scmp.ne.s32.totalorder %s52, %s53
    %p65 = scmp.eq.s32.totalorder %s15, 1
    %p66 = por %p64, %p65
    %p68 = scmp.ne.s32.totalorder %s53, %s67
    %p69 = scmp.eq.s32.totalorder %s15, 0
    %p70 = por %p68, %p69
    %s71 = ssub.s32 %s16, %s28
    %s72 = ssub.s32 %s17, %s24
    %s73 = sor.u32 %s71, %s72
    %p74 = scmp.eq.s32.totalorder %s73, 0
    %s76 = sadd.s32 %s75, 1
    %s77 = scalar_select %p74, %s75, %s76
    %p80 = pneg %p74
    %p81 = scmp.eq.s32.totalorder %s9, 1
    %p82 = por %p80, %p81
    %p83 = scmp.ne.s32.totalorder %s75, %s78
    %p84 = scmp.eq.s32.totalorder %s9, 0
    %p85 = por %p83, %p84
    %p86 = scmp.ne.s32.totalorder %s75, %s78
    %p87 = scmp.eq.s32.totalorder %s14, 1
    %p88 = por %p86, %p87
    %p89 = scmp.ne.s32.totalorder %s78, %s79
    %p90 = scmp.eq.s32.totalorder %s14, 0
    %p91 = por %p89, %p90
    %p92 = scmp.ne.s32.totalorder %s78, %s79
    %p93 = scmp.eq.s32.totalorder %s15, 1
    %p94 = por %p92, %p93
    %p96 = scmp.ne.s32.totalorder %s79, %s95
    %p97 = scmp.eq.s32.totalorder %s15, 0
    %p98 = por %p96, %p97
    %s99 = ssub.s32 %s16, %s28
    %s100 = ssub.s32 %s17, %s24
    %s101 = sor.u32 %s99, %s100
    %p102 = scmp.eq.s32.totalorder %s101, 0
    %s104 = sadd.s32 %s103, 1
    %s105 = scalar_select %p102, %s103, %s104
    %p108 = pneg %p102
    %p109 = scmp.eq.s32.totalorder %s9, 1
    %p110 = por %p108, %p109
    %p111 = scmp.ne.s32.totalorder %s103, %s106
    %p112 = scmp.eq.s32.totalorder %s9, 0
    %p113 = por %p111, %p112
    %p114 = scmp.ne.s32.totalorder %s103, %s106
    %p115 = scmp.eq.s32.totalorder %s14, 1
    %p116 = por %p114, %p115
    %p117 = scmp.ne.s32.totalorder %s106, %s107
    %p118 = scmp.eq.s32.totalorder %s14, 0
    %p119 = por %p117, %p118
    %p120 = scmp.ne.s32.totalorder %s106, %s107
    %p121 = scmp.eq.s32.totalorder %s15, 1
    %p122 = por %p120, %p121
    %p124 = scmp.ne.s32.totalorder %s107, %s123
    %p125 = scmp.eq.s32.totalorder %s15, 0
    %p126 = por %p124, %p125
    %p127 = scmp.le.s32.totalorder 1, %s9
    %p128 = scmp.lt.s32.totalorder %s9, 3
    %p129 = pnand %p127, %p128
    %p130 = pneg %p129
    // Predicated region
    $region9: #{sab_forward.2} parent=5 // pred_check
      _
    $region10: #{sab_forward.2} parent=5 // pred_check_branch
      %132 = sbr.rel (%p129) target = $region12
    $region11: #{sab_forward.2} parent=5 // pred_region
      %s133 = ssub.s32 %s9, 1
      // Predicated region
      $region13: #{sab_forward.2} parent=11 // pred_check
        %p134 = pneg %p42
      $region14: #{sab_forward.2} parent=11 // pred_check_branch
        %136 = sbr.rel (%p134) target = $region16
      $region15: #{sab_forward.2} parent=11 // pred_region
        _
      $region16: #{sab_forward.2} parent=11 // pred_fallthru
        _
      // Predicated region
      $region17: #{sab_forward.2} parent=11 // pred_check
        %p137 = pneg %p63
      $region18: #{sab_forward.2} parent=11 // pred_check_branch
        %139 = sbr.rel (%p137) target = $region20
      $region19: #{sab_forward.2} parent=11 // pred_region
        _
      $region20: #{sab_forward.2} parent=11 // pred_fallthru
        _
    $region12: #{sab_forward.2} parent=5 // pred_fallthru
      _
    %p140 = scmp.lt.s32.totalorder %s9, 2
    // Predicated region
    $region21: #{sab_forward.2} parent=5 // pred_check
      %p141 = pneg %p140
    $region22: #{sab_forward.2} parent=5 // pred_check_branch
      %143 = sbr.rel (%p141) target = $region24
    $region23: #{sab_forward.2} parent=5 // pred_region
      // Predicated region
      $region25: #{sab_forward.2} parent=23 // pred_check
        %p144 = pneg %p85
      $region26: #{sab_forward.2} parent=23 // pred_check_branch
        %146 = sbr.rel (%p144) target = $region28
      $region27: #{sab_forward.2} parent=23 // pred_region
        %s147 = smul.u32 2, %s17
        %p148 = scmp.lt.s32.totalorder %s16, 1
        %s149 = scalar_select %p148, %s16, 1
        %p150 = scmp.lt.s32.totalorder %s147, 1
        %s151 = scalar_select %p150, %s147, 1
        %s152 = smul.addr %s149, 4
        %s153 = sadd.s32 %s151, %s152
        %s154 = smul.addr %s153, 8
        %s155 = scalar_lea.vmem %s2, %s154
        %s156 = smul.u32 2, %s17
      $region28: #{sab_forward.2} parent=23 // pred_fallthru
        _
    $region24: #{sab_forward.2} parent=5 // pred_fallthru
      _
    %p157 = scmp.le.s32.totalorder 1, %s9
    %p158 = scmp.lt.s32.totalorder %s9, 3
    %p159 = pnand %p157, %p158
    %p160 = pneg %p159
    // Predicated region
    $region29: #{sab_forward.2} parent=5 // pred_check
      _
    $region30: #{sab_forward.2} parent=5 // pred_check_branch
      %162 = sbr.rel (%p159) target = $region32
    $region31: #{sab_forward.2} parent=5 // pred_region
      %s163 = ssub.s32 %s9, 1
      %p164 = pneg %p42
      %p165 = pneg %p39
      %p166 = pneg %p63
      %p167 = pneg %p60
      %s168 = smul.u32 2, %s19
      %p169 = scmp.lt.s32.totalorder %s18, 1
      %s170 = scalar_select %p169, %s18, 1
      %p171 = scmp.lt.s32.totalorder %s168, 1
      %s172 = scalar_select %p171, %s168, 1
      %s173 = smul.addr %s170, 4
      %s174 = sadd.s32 %s172, %s173
      %s175 = smul.addr %s174, 8
      %s176 = scalar_lea.vmem %s2, %s175
      %p177 = pneg %p91
      %p178 = pneg %p88
      %p179 = pneg %p119
      %p180 = pneg %p116
      %s181 = smul.u32 2, %s19
      %p182 = scmp.lt.s32.totalorder %s18, 1
      %s183 = scalar_select %p182, %s18, 1
      %p184 = scmp.lt.s32.totalorder %s181, 1
      %s185 = scalar_select %p184, %s181, 1
      %s186 = smul.addr %s183, 6
      %s187 = sadd.s32 %s185, %s186
      %s188 = smul.addr %s187, 8
      %s189 = scalar_lea.vmem %s3, %s188
      %s190 = smul.u32 2, %s19
      %p191 = scmp.lt.s32.totalorder %s18, 1
      %s192 = scalar_select %p191, %s18, 1
      %p193 = scmp.lt.s32.totalorder %s190, 1
      %s194 = scalar_select %p193, %s190, 1
      %s195 = smul.addr %s192, 4
      %s196 = sadd.s32 %s194, %s195
      %s197 = smul.addr %s196, 8
      %s198 = scalar_lea.vmem %s2, %s197
      %s199 = smul.u32 2, %s19
      %s200 = smul.u32 2, %s19
      %p201 = scmp.lt.s32.totalorder %s18, 1
      %s202 = scalar_select %p201, %s18, 1
      %p203 = scmp.lt.s32.totalorder %s200, 1
      %s204 = scalar_select %p203, %s200, 1
      %s205 = smul.addr %s202, 6
      %s206 = sadd.s32 %s204, %s205
      %s207 = smul.addr %s206, 8
      %s208 = scalar_lea.vmem %s3, %s207
      %s209 = smul.u32 2, %s19
      %v210 = vld [vmem:[%s0] sm:$0xff]
      %v211 = vld [vmem:[%s0 + $0x8] sm:$0xff]
      %v212 = vld [vmem:[%s0 + $0x10] sm:$0xf]
      %v213 = vld [vmem:[%s198] sm:$0xff]
      %v214 = vld [vmem:[%s198 + $0x8] sm:$0xff]
      %v215 = vld [vmem:[%s198 + $0x10] sm:$0xff]
      %v216 = vld [vmem:[%s198 + $0x18] sm:$0xff]
      %v217 = vld [vmem:[%s1] sm:$0xff]
      %v218 = vld [vmem:[%s1 + $0x8] sm:$0xff]
      %v219 = vld [vmem:[%s1 + $0x10] sm:$0xf]
      %221 = vset.pattern.permute.xlu0 0
      %222 = vperm.xlu0 %221, %v217
      %v223 = vpop.permute.xlu0 %222
      %226 = vset.pattern.permute.xlu0 0
      %227 = vperm.xlu0 %226, %v218
      %v228 = vpop.permute.xlu0 %227
      %231 = vset.pattern.permute.xlu0 0
      %232 = vperm.xlu0 %231, %v219
      %v233 = vpop.permute.xlu0 %232
      %vm235 = vcmask 130048
      %v237 = vsel %vm235, %v210, 0
      %v240 = vsel %vm235, %v211, 0
      %v243 = vsel %vm235, %v212, 0
      %245 = vmatprep.subr.mxu0 0.0
      %246 = vmatpush1.msra.mxu0 0.0
      %247 = vmatprep.subr.mxu0 0.0
      %248 = vmatpush1.msra.mxu0 0.0
      %249 = vmatprep.subr.mxu0 0.0
      %250 = vmatpush1.msra.mxu0 0.0
      %251 = vmatprep.subr.mxu0 0.0
      %252 = vmatpush1.msra.mxu0 0.0
      %253 = vmatprep.subr.mxu0 0.0
      %254 = vmatpush1.msra.mxu0 0.0
      %255 = vmatprep.subr.mxu0 0.0
      %256 = vmatpush1.msra.mxu0 0.0
      %257 = vmatprep.subr.mxu0 0.0
      %258 = vmatpush1.msra.mxu0 0.0
      %259 = vmatprep.subr.mxu0 0.0
      %260 = vmatpush1.msra.mxu0 0.0
      %261 = vmatprep.subr.mxu0 0.0
      %262 = vmatpush1.msra.mxu0 0.0
      %263 = vmatprep.subr.mxu0 0.0
      %264 = vmatpush1.msra.mxu0 0.0
      %265 = vmatprep.subr.mxu0 0.0
      %266 = vmatpush1.msra.mxu0 0.0
      %267 = vmatprep.subr.mxu0 0.0
      %268 = vmatpush1.msra.mxu0 0.0
      %269 = vmatprep.subr.mxu0 0.0
      %270 = vmatpush1.msra.mxu0 0.0
      %271 = vmatprep.subr.mxu0 0.0
      %272 = vmatpush1.msra.mxu0 0.0
      %273 = vmatprep.subr.mxu0 %v216
      %274 = vmatpush1.msra.mxu0 %v215
      %275 = vmatprep.subr.mxu0 %v214
      %276 = vmatpush1.msra.mxu0 %v213
      %277 = vmatprep.subr.mxu0 0.0
      %278 = vmatpush2.msra.mxu0 0.0
      %279 = vmatprep.subr.mxu0 0.0
      %280 = vmatpush2.msra.mxu0 0.0
      %281 = vmatprep.subr.mxu0 0.0
      %282 = vmatpush2.msra.mxu0 0.0
      %283 = vmatprep.subr.mxu0 0.0
      %284 = vmatpush2.msra.mxu0 0.0
      %285 = vmatprep.subr.mxu0 0.0
      %286 = vmatpush2.msra.mxu0 0.0
      %287 = vmatprep.subr.mxu0 0.0
      %288 = vmatpush2.msra.mxu0 0.0
      %289 = vmatprep.subr.mxu0 0.0
      %290 = vmatpush2.msra.mxu0 0.0
      %291 = vmatprep.subr.mxu0 0.0
      %292 = vmatpush2.msra.mxu0 0.0
      %293 = vmatprep.subr.mxu0 0.0
      %294 = vmatpush2.msra.mxu0 0.0
      %295 = vmatprep.subr.mxu0 0.0
      %296 = vmatpush2.msra.mxu0 0.0
      %297 = vmatprep.subr.mxu0 0.0
      %298 = vmatpush2.msra.mxu0 0.0
      %299 = vmatprep.subr.mxu0 0.0
      %300 = vmatpush2.msra.mxu0 0.0
      %301 = vmatprep.subr.mxu0 0.0
      %302 = vmatpush2.msra.mxu0 0.0
      %303 = vmatprep.subr.mxu0 0.0
      %304 = vmatpush2.msra.mxu0 0.0
      %305 = vmatprep.subr.mxu0 0.0
      %306 = vmatpush2.msra.mxu0 0.0
      %307 = vmatprep.subr.mxu0 0.0
      %308 = vmatpush2.msra.mxu0 0.0
      %309 = vmatprep.mubr.f32.mxu0 0.0
      %310 = vmatmul.mubr.f32.gmra.mxu0 %v237
      %v311 = vpop.f32.mrf.mxu0
      %v312 = vadd.f32 %v223, %v311
      %v313 = vpop.f32.mrf.mxu0
      %v314 = vadd.f32 %v223, %v313
      %315 = vmatprep.mubr.f32.mxu0 0.0
      %316 = vmatmul.mubr.f32.gmra.mxu0 %v240
      %v317 = vpop.f32.mrf.mxu0
      %v318 = vadd.f32 %v228, %v317
      %v319 = vpop.f32.mrf.mxu0
      %v320 = vadd.f32 %v228, %v319
      %321 = vmatprep.mubr.f32.mxu0 0.0
      %322 = vmatmul.mubr.f32.gmra.mxu0 %v243
      %v323 = vpop.f32.mrf.mxu0
      %v324 = vadd.f32 %v233, %v323
      %v325 = vpop.f32.mrf.mxu0
      %v326 = vadd.f32 %v233, %v325
      %327 = vdwg.mxu0
      %328 = vst [vmem:[%s208] sm:$0xff] %v312
      %329 = vst [vmem:[%s208 + $0x8] sm:$0xff] %v314
      %330 = vst [vmem:[%s208 + $0x10] sm:$0xff] %v318
      %331 = vst [vmem:[%s208 + $0x18] sm:$0xff] %v320
      %332 = vst [vmem:[%s208 + $0x20] sm:$0xf] %v324
      %333 = vst [vmem:[%s208 + $0x28] sm:$0xf] %v326
      %s334 = smul.u32 2, %s19
      %p335 = scmp.lt.s32.totalorder %s18, 1
      %s336 = scalar_select %p335, %s18, 1
      %p337 = scmp.lt.s32.totalorder %s334, 1
      %s338 = scalar_select %p337, %s334, 1
      %s339 = smul.addr %s336, 6
      %s340 = sadd.s32 %s338, %s339
      %s341 = smul.addr %s340, 8
      %s342 = scalar_lea.vmem %s3, %s341
      // Predicated region
      $region33: #{sab_forward.2} parent=31 // pred_check
        %p343 = pneg %p116
      $region34: #{sab_forward.2} parent=31 // pred_check_branch
        %345 = sbr.rel (%p343) target = $region36
      $region35: #{sab_forward.2} parent=31 // pred_region
        %s346 = smul.u32 2, %s19
      $region36: #{sab_forward.2} parent=31 // pred_fallthru
        _
    $region32: #{sab_forward.2} parent=5 // pred_fallthru
      _
    %p347 = scmp.le.s32.totalorder 2, %s9
    // Predicated region
    $region37: #{sab_forward.2} parent=5 // pred_check
      %p348 = pneg %p347
    $region38: #{sab_forward.2} parent=5 // pred_check_branch
      %350 = sbr.rel (%p348) target = $region40
    $region39: #{sab_forward.2} parent=5 // pred_region
      %s351 = ssub.s32 %s9, 2
      // Predicated region
      $region41: #{sab_forward.2} parent=39 // pred_check
        %p352 = pneg %p122
      $region42: #{sab_forward.2} parent=39 // pred_check_branch
        %354 = sbr.rel (%p352) target = $region44
      $region43: #{sab_forward.2} parent=39 // pred_region
        %s355 = smul.u32 2, %s21
        %p356 = scmp.lt.s32.totalorder %s20, 1
        %s357 = scalar_select %p356, %s20, 1
        %p358 = scmp.lt.s32.totalorder %s355, 1
        %s359 = scalar_select %p358, %s355, 1
        %s360 = smul.addr %s357, 6
        %s361 = sadd.s32 %s359, %s360
        %s362 = smul.addr %s361, 8
        %s363 = scalar_lea.vmem %s3, %s362
      $region44: #{sab_forward.2} parent=39 // pred_fallthru
        _
    $region40: #{sab_forward.2} parent=5 // pred_fallthru
      _
  $region6: #{sab_forward.2} parent=0 // loop_footer
    %s13 = sadd.s32 1, %s9
  $region7: #{sab_forward.2} parent=0 // loop_footer_branch
    %8 = sbr.rel target = $region3
  $region8: #{sab_forward.2} parent=0 // loop_exit
    _

// kernel: sab_forward.3
$region0: #{sab_forward.3}
  #allocation0 [shape = 'u32[]', space=smem, size = 0x4, offset = 0x4, fixed_abs, tag = 'smem constant byte address 0x4 - core index']
  #allocation1 [shape = 'u32[144,128]{1,0:T(1,128)}', space=vmem, size = 0x12000, scoped, tag = 'internal scratch']
  #allocation2 [shape = 'f32[16,128]{1,0:T(8,128)}', space=vmem, size = 0x2000, scoped, tag = 'scratch operand']
  #allocation3 [shape = 'f32[1,128]{1,0:T(1,128)}', space=vmem, size = 0x200, scoped, tag = 'scratch operand']
  #allocation4 [shape = 'f32[1,128]{1,0:T(1,128)}', space=vmem, size = 0x200, scoped, tag = 'scratch operand']
  #allocation5 [shape = 'f32[1]{0:T(128)S(6)}', space=smem, size = 0x200, scoped, tag = 'scoped memory for sab_forward.3']
  %s0 = inlined_call_operand.<no memory space> [shape: f32[1], index: 0, kind: input, shape index: {}]
  %s1 = inlined_call_operand.vmem [shape: f32[2,2,256], index: 1, kind: input, shape index: {}]
  %s2 = inlined_call_operand.vmem [shape: f32[2,2,256], index: 2, kind: input, shape index: {}]
  %s3 = inlined_call_operand.vmem [shape: f32[2,16,256], index: 3, kind: input, shape index: {}]
  %s4 = inlined_call_operand.vmem [shape: f32[2,16,256], index: 4, kind: input, shape index: {}]
  %s5 = inlined_call_operand.vmem [shape: f32[16,16], index: 5, kind: input, shape index: {}]
  %s6 = inlined_call_operand.vmem [shape: f32[16,1], index: 6, kind: input, shape index: {}]
  %s7 = inlined_call_operand.vmem [shape: f32[2,16,256], index: 7, kind: output, shape index: {}]
  %s8 = sld [smem:[#allocation0]]
  $region141: #{sab_forward.3} parent=0
    _
  %s10 = ssub.s32 1, %s8
  %s11 = scalar_select 0, %s10, %s8
  %12 = sst [smem:[#allocation5]] %s0
  $region1: #{sab_forward.3} parent=0
    #allocation6 [shape = 'u8[16384]{0}', space=vmem, size = 0x4000, scoped, tag = 'input window, operand 4']
    #allocation7 [shape = 'u8[16384]{0}', space=vmem, size = 0x4000, scoped, tag = 'output window, operand 0']
    loop: start=0, step=1, limit=10
    $region2: #{sab_forward.3} parent=1 // loop_pre_header
      _
    $region3: #{sab_forward.3} parent=1 // loop_header
      %s14 = sphi 0, %s18
      %p15 = scmp.ge.s32.totalorder %s14, 10
      %s21 = sphi 0, %s40
      %s22 = sphi 0, %s36
      %s23 = sphi 0, %s32
      %s24 = sphi 0, %s21
      %s25 = sphi 0, %s22
      %s26 = sphi 0, %s23
      %s27 = sphi 0, %s24
      %s28 = sphi 0, %s25
      %s29 = sphi 0, %s26
      %s41 = sphi 0, %s41
      %s43 = sphi 0, %s41
      %s44 = sphi 0, %s43
      %s58 = sphi 0, %s44
      %s66 = sphi 0, %s68
      %s69 = sphi 0, %s66
      %s70 = sphi 0, %s69
      %s86 = sphi 0, %s70
      %s92 = sphi 0, %s94
      %s95 = sphi 0, %s92
      %s96 = sphi 0, %s95
      %s112 = sphi 0, %s96
      %s118 = sphi 0, %s120
      %s121 = sphi 0, %s118
      %s122 = sphi 0, %s121
      %s138 = sphi 0, %s122
      %s146 = sphi 0, %s148
      %s149 = sphi 0, %s146
      %s150 = sphi 0, %s149
      %s166 = sphi 0, %s150
      %s170 = sphi 0, %s170
      %s172 = sphi 0, %s170
      %s173 = sphi 0, %s172
      %s187 = sphi 0, %s173
      %s191 = sphi 0, %s191
      %s193 = sphi 0, %s191
      %s194 = sphi 0, %s193
      %s208 = sphi 0, %s194
      %s216 = sphi 0, %s218
      %s219 = sphi 0, %s216
      %s220 = sphi 0, %s219
      %s236 = sphi 0, %s220
    $region4: #{sab_forward.3} parent=1 // loop_header_branch
      %17 = sbr.rel (%p15) target = $region8
    $region5: #{sab_forward.3} parent=1 // loop_body
      %s19 = ssub.s32 %s14, 1
      %s20 = ssub.s32 %s14, 2
      %s30 = sadd.s32 1, %s23
      %p31 = scmp.ge.s32.totalorder %s30, 2
      %s32 = scalar_select %p31, 0, %s30
      %s33 = sadd.s32 1, %s22
      %s34 = scalar_select %p31, %s33, %s22
      %p35 = scmp.ge.s32.totalorder %s34, 2
      %s36 = scalar_select %p35, 0, %s34
      %s37 = sadd.s32 1, %s21
      %s38 = scalar_select %p35, %s37, %s21
      %p39 = scmp.ge.s32.totalorder %s38, 2
      %s40 = scalar_select %p39, 0, %s38
      %s42 = sadd.s32 %s41, 1
      %p45 = scmp.eq.s32.totalorder %s14, 7
      %p46 = scmp.ne.s32.totalorder %s41, %s43
      %p47 = scmp.eq.s32.totalorder %s14, 0
      %p48 = por %p46, %p47
      %p49 = scmp.ne.s32.totalorder %s41, %s43
      %p50 = scmp.eq.s32.totalorder %s19, 7
      %p51 = por %p49, %p50
      %p52 = scmp.ne.s32.totalorder %s43, %s44
      %p53 = scmp.eq.s32.totalorder %s19, 0
      %p54 = por %p52, %p53
      %p55 = scmp.ne.s32.totalorder %s43, %s44
      %p56 = scmp.eq.s32.totalorder %s20, 7
      %p57 = por %p55, %p56
      %p59 = scmp.ne.s32.totalorder %s44, %s58
      %p60 = scmp.eq.s32.totalorder %s20, 0
      %p61 = por %p59, %p60
      %s62 = ssub.s32 %s21, %s40
      %s63 = ssub.s32 %s22, %s36
      %s64 = sor.u32 %s62, %s63
      %p65 = scmp.eq.s32.totalorder %s64, 0
      %s67 = sadd.s32 %s66, 1
      %s68 = scalar_select %p65, %s66, %s67
      %p71 = pneg %p65
      %p72 = scmp.eq.s32.totalorder %s14, 7
      %p73 = por %p71, %p72
      %p74 = scmp.ne.s32.totalorder %s66, %s69
      %p75 = scmp.eq.s32.totalorder %s14, 0
      %p76 = por %p74, %p75
      %p77 = scmp.ne.s32.totalorder %s66, %s69
      %p78 = scmp.eq.s32.totalorder %s19, 7
      %p79 = por %p77, %p78
      %p80 = scmp.ne.s32.totalorder %s69, %s70
      %p81 = scmp.eq.s32.totalorder %s19, 0
      %p82 = por %p80, %p81
      %p83 = scmp.ne.s32.totalorder %s69, %s70
      %p84 = scmp.eq.s32.totalorder %s20, 7
      %p85 = por %p83, %p84
      %p87 = scmp.ne.s32.totalorder %s70, %s86
      %p88 = scmp.eq.s32.totalorder %s20, 0
      %p89 = por %p87, %p88
      %s90 = ssub.s32 %s21, %s40
      %p91 = scmp.eq.s32.totalorder %s90, 0
      %s93 = sadd.s32 %s92, 1
      %s94 = scalar_select %p91, %s92, %s93
      %p97 = pneg %p91
      %p98 = scmp.eq.s32.totalorder %s14, 7
      %p99 = por %p97, %p98
      %p100 = scmp.ne.s32.totalorder %s92, %s95
      %p101 = scmp.eq.s32.totalorder %s14, 0
      %p102 = por %p100, %p101
      %p103 = scmp.ne.s32.totalorder %s92, %s95
      %p104 = scmp.eq.s32.totalorder %s19, 7
      %p105 = por %p103, %p104
      %p106 = scmp.ne.s32.totalorder %s95, %s96
      %p107 = scmp.eq.s32.totalorder %s19, 0
      %p108 = por %p106, %p107
      %p109 = scmp.ne.s32.totalorder %s95, %s96
      %p110 = scmp.eq.s32.totalorder %s20, 7
      %p111 = por %p109, %p110
      %p113 = scmp.ne.s32.totalorder %s96, %s112
      %p114 = scmp.eq.s32.totalorder %s20, 0
      %p115 = por %p113, %p114
      %s116 = ssub.s32 %s21, %s40
      %p117 = scmp.eq.s32.totalorder %s116, 0
      %s119 = sadd.s32 %s118, 1
      %s120 = scalar_select %p117, %s118, %s119
      %p123 = pneg %p117
      %p124 = scmp.eq.s32.totalorder %s14, 7
      %p125 = por %p123, %p124
      %p126 = scmp.ne.s32.totalorder %s118, %s121
      %p127 = scmp.eq.s32.totalorder %s14, 0
      %p128 = por %p126, %p127
      %p129 = scmp.ne.s32.totalorder %s118, %s121
      %p130 = scmp.eq.s32.totalorder %s19, 7
      %p131 = por %p129, %p130
      %p132 = scmp.ne.s32.totalorder %s121, %s122
      %p133 = scmp.eq.s32.totalorder %s19, 0
      %p134 = por %p132, %p133
      %p135 = scmp.ne.s32.totalorder %s121, %s122
      %p136 = scmp.eq.s32.totalorder %s20, 7
      %p137 = por %p135, %p136
      %p139 = scmp.ne.s32.totalorder %s122, %s138
      %p140 = scmp.eq.s32.totalorder %s20, 0
      %p141 = por %p139, %p140
      %s142 = ssub.s32 %s21, %s40
      %s143 = ssub.s32 %s22, %s36
      %s144 = sor.u32 %s142, %s143
      %p145 = scmp.eq.s32.totalorder %s144, 0
      %s147 = sadd.s32 %s146, 1
      %s148 = scalar_select %p145, %s146, %s147
      %p151 = pneg %p145
      %p152 = scmp.eq.s32.totalorder %s14, 7
      %p153 = por %p151, %p152
      %p154 = scmp.ne.s32.totalorder %s146, %s149
      %p155 = scmp.eq.s32.totalorder %s14, 0
      %p156 = por %p154, %p155
      %p157 = scmp.ne.s32.totalorder %s146, %s149
      %p158 = scmp.eq.s32.totalorder %s19, 7
      %p159 = por %p157, %p158
      %p160 = scmp.ne.s32.totalorder %s149, %s150
      %p161 = scmp.eq.s32.totalorder %s19, 0
      %p162 = por %p160, %p161
      %p163 = scmp.ne.s32.totalorder %s149, %s150
      %p164 = scmp.eq.s32.totalorder %s20, 7
      %p165 = por %p163, %p164
      %p167 = scmp.ne.s32.totalorder %s150, %s166
      %p168 = scmp.eq.s32.totalorder %s20, 0
      %p169 = por %p167, %p168
      %s171 = sadd.s32 %s170, 1
      %p174 = scmp.eq.s32.totalorder %s14, 7
      %p175 = scmp.ne.s32.totalorder %s170, %s172
      %p176 = scmp.eq.s32.totalorder %s14, 0
      %p177 = por %p175, %p176
      %p178 = scmp.ne.s32.totalorder %s170, %s172
      %p179 = scmp.eq.s32.totalorder %s19, 7
      %p180 = por %p178, %p179
      %p181 = scmp.ne.s32.totalorder %s172, %s173
      %p182 = scmp.eq.s32.totalorder %s19, 0
      %p183 = por %p181, %p182
      %p184 = scmp.ne.s32.totalorder %s172, %s173
      %p185 = scmp.eq.s32.totalorder %s20, 7
      %p186 = por %p184, %p185
      %p188 = scmp.ne.s32.totalorder %s173, %s187
      %p189 = scmp.eq.s32.totalorder %s20, 0
      %p190 = por %p188, %p189
      %s192 = sadd.s32 %s191, 1
      %p195 = scmp.eq.s32.totalorder %s14, 7
      %p196 = scmp.ne.s32.totalorder %s191, %s193
      %p197 = scmp.eq.s32.totalorder %s14, 0
      %p198 = por %p196, %p197
      %p199 = scmp.ne.s32.totalorder %s191, %s193
      %p200 = scmp.eq.s32.totalorder %s19, 7
      %p201 = por %p199, %p200
      %p202 = scmp.ne.s32.totalorder %s193, %s194
      %p203 = scmp.eq.s32.totalorder %s19, 0
      %p204 = por %p202, %p203
      %p205 = scmp.ne.s32.totalorder %s193, %s194
      %p206 = scmp.eq.s32.totalorder %s20, 7
      %p207 = por %p205, %p206
      %p209 = scmp.ne.s32.totalorder %s194, %s208
      %p210 = scmp.eq.s32.totalorder %s20, 0
      %p211 = por %p209, %p210
      %s212 = ssub.s32 %s21, %s40
      %s213 = ssub.s32 %s22, %s36
      %s214 = sor.u32 %s212, %s213
      %p215 = scmp.eq.s32.totalorder %s214, 0
      %s217 = sadd.s32 %s216, 1
      %s218 = scalar_select %p215, %s216, %s217
      %p221 = pneg %p215
      %p222 = scmp.eq.s32.totalorder %s14, 7
      %p223 = por %p221, %p222
      %p224 = scmp.ne.s32.totalorder %s216, %s219
      %p225 = scmp.eq.s32.totalorder %s14, 0
      %p226 = por %p224, %p225
      %p227 = scmp.ne.s32.totalorder %s216, %s219
      %p228 = scmp.eq.s32.totalorder %s19, 7
      %p229 = por %p227, %p228
      %p230 = scmp.ne.s32.totalorder %s219, %s220
      %p231 = scmp.eq.s32.totalorder %s19, 0
      %p232 = por %p230, %p231
      %p233 = scmp.ne.s32.totalorder %s219, %s220
      %p234 = scmp.eq.s32.totalorder %s20, 7
      %p235 = por %p233, %p234
      %p237 = scmp.ne.s32.totalorder %s220, %s236
      %p238 = scmp.eq.s32.totalorder %s20, 0
      %p239 = por %p237, %p238
      %p240 = scmp.le.s32.totalorder 1, %s14
      %p241 = scmp.lt.s32.totalorder %s14, 9
      %p242 = pnand %p240, %p241
      %p243 = pneg %p242
      // Predicated region
      $region9: #{sab_forward.3} parent=5 // pred_check
        _
      $region10: #{sab_forward.3} parent=5 // pred_check_branch
        %245 = sbr.rel (%p242) target = $region12
      $region11: #{sab_forward.3} parent=5 // pred_region
        %s246 = ssub.s32 %s14, 1
        // Predicated region
        $region13: #{sab_forward.3} parent=11 // pred_check
          %p247 = pneg %p54
        $region14: #{sab_forward.3} parent=11 // pred_check_branch
          %249 = sbr.rel (%p247) target = $region16
        $region15: #{sab_forward.3} parent=11 // pred_region
          _
        $region16: #{sab_forward.3} parent=11 // pred_fallthru
          _
        // Predicated region
        $region17: #{sab_forward.3} parent=11 // pred_check
          %p250 = pneg %p183
        $region18: #{sab_forward.3} parent=11 // pred_check_branch
          %252 = sbr.rel (%p250) target = $region20
        $region19: #{sab_forward.3} parent=11 // pred_region
          _
        $region20: #{sab_forward.3} parent=11 // pred_fallthru
          _
        // Predicated region
        $region21: #{sab_forward.3} parent=11 // pred_check
          %p253 = pneg %p204
        $region22: #{sab_forward.3} parent=11 // pred_check_branch
          %255 = sbr.rel (%p253) target = $region24
        $region23: #{sab_forward.3} parent=11 // pred_region
          _
        $region24: #{sab_forward.3} parent=11 // pred_fallthru
          _
      $region12: #{sab_forward.3} parent=5 // pred_fallthru
        _
      %p256 = scmp.lt.s32.totalorder %s14, 8
      // Predicated region
      $region25: #{sab_forward.3} parent=5 // pred_check
        %p257 = pneg %p256
      $region26: #{sab_forward.3} parent=5 // pred_check_branch
        %259 = sbr.rel (%p257) target = $region28
      $region27: #{sab_forward.3} parent=5 // pred_region
        // Predicated region
        $region29: #{sab_forward.3} parent=27 // pred_check
          %p260 = pneg %p76
        $region30: #{sab_forward.3} parent=27 // pred_check_branch
          %262 = sbr.rel (%p260) target = $region32
        $region31: #{sab_forward.3} parent=27 // pred_region
          %p263 = scmp.lt.s32.totalorder %s21, 1
          %s264 = scalar_select %p263, %s21, 1
          %p265 = scmp.lt.s32.totalorder %s22, 1
          %s266 = scalar_select %p265, %s22, 1
          %s267 = smul.addr %s264, 2
          %s268 = sadd.s32 %s266, %s267
          %s269 = smul.addr %s268, 2
          %s270 = scalar_lea.vmem %s1, %s269
        $region32: #{sab_forward.3} parent=27 // pred_fallthru
          _
        // Predicated region
        $region33: #{sab_forward.3} parent=27 // pred_check
          %p271 = pneg %p102
        $region34: #{sab_forward.3} parent=27 // pred_check_branch
          %273 = sbr.rel (%p271) target = $region36
        $region35: #{sab_forward.3} parent=27 // pred_region
          %p274 = scmp.lt.s32.totalorder %s21, 1
          %s275 = scalar_select %p274, %s21, 1
          %s276 = smul.addr %s275, 2
          %s277 = smul.addr %s276, 2
          %s278 = scalar_lea.vmem %s2, %s277
        $region36: #{sab_forward.3} parent=27 // pred_fallthru
          _
        // Predicated region
        $region37: #{sab_forward.3} parent=27 // pred_check
          %p279 = pneg %p128
        $region38: #{sab_forward.3} parent=27 // pred_check_branch
          %281 = sbr.rel (%p279) target = $region40
        $region39: #{sab_forward.3} parent=27 // pred_region
          %p282 = scmp.lt.s32.totalorder %s21, 1
          %s283 = scalar_select %p282, %s21, 1
          %s284 = smul.addr %s283, 4
          %s285 = smul.addr %s284, 8
          %s286 = scalar_lea.vmem %s3, %s285
        $region40: #{sab_forward.3} parent=27 // pred_fallthru
          _
        // Predicated region
        $region41: #{sab_forward.3} parent=27 // pred_check
          %p287 = pneg %p156
        $region42: #{sab_forward.3} parent=27 // pred_check_branch
          %289 = sbr.rel (%p287) target = $region44
        $region43: #{sab_forward.3} parent=27 // pred_region
          %s290 = sand.u32 %s146, 1
          %s291 = sand.u32 %s146, 1
          %s292 = smul.addr %s291, 16
          %s293 = scalar_lea.vmem [#allocation6], %s292
          %s294 = smul.addr %s21, 4
          %s295 = sadd.s32 %s22, %s294
          %s296 = smul.addr %s295, 8
          %s297 = scalar_lea.vmem %s4, %s296
          // Predicated region
          $region45: #{sab_forward.3} parent=43 // pred_check
            _
          $region46: #{sab_forward.3} parent=43 // pred_check_branch
            %299 = sbr.rel (0) target = $region48
          $region47: #{sab_forward.3} parent=43 // pred_region
            // Predicated region
            $region49: #{sab_forward.3} parent=47 // pred_check
              _
            $region50: #{sab_forward.3} parent=47 // pred_check_branch
              %301 = sbr.rel (0) target = $region52
            $region51: #{sab_forward.3} parent=47 // pred_region
              // Predicated region
              $region64: #{sab_forward.3} parent=51 // pred_check
                _
              $region65: #{sab_forward.3} parent=51 // pred_check_branch
                %319 = sbr.rel (0) target = $region67
              $region66: #{sab_forward.3} parent=51 // pred_region
                loop: start=0, step=1, limit=1
                $region68: #{sab_forward.3} parent=66 // loop_pre_header
                  _
                $region69: #{sab_forward.3} parent=66 // loop_header
                  %s321 = sphi 0, %s325
                  %p322 = scmp.ge.s32.totalorder %s321, 1
                  %s326 = sphi %s297, %s297
                  %s327 = sphi %s293, %s293
                $region70: #{sab_forward.3} parent=66 // loop_header_branch
                  %324 = sbr.rel (%p322) target = $region74
                $region71: #{sab_forward.3} parent=66 // loop_body
                  %v328 = vld [vmem:[%s326] sm:$0xff]
                  %329 = vst [vmem:[%s327] sm:$0xff] %v328
                  %v330 = vld [vmem:[%s326 + $0x10] sm:$0xff]
                  %331 = vst [vmem:[%s327 + $0x8] sm:$0xff] %v330
                $region72: #{sab_forward.3} parent=66 // loop_footer
                  %s325 = sadd.s32 1, %s321
                $region73: #{sab_forward.3} parent=66 // loop_footer_branch
                  %320 = sbr.rel target = $region69
                $region74: #{sab_forward.3} parent=66 // loop_exit
                  _
              $region67: #{sab_forward.3} parent=51 // pred_fallthru
                _
              // Predicated region
              $region75: #{sab_forward.3} parent=51 // pred_check
                _
              $region76: #{sab_forward.3} parent=51 // pred_check_branch
                %333 = sbr.rel target = $region78
              $region77: #{sab_forward.3} parent=51 // pred_region
                _
              $region78: #{sab_forward.3} parent=51 // pred_fallthru
                _
            $region52: #{sab_forward.3} parent=47 // pred_fallthru
              _
            // Predicated region
            $region53: #{sab_forward.3} parent=47 // pred_check
              _
            $region54: #{sab_forward.3} parent=47 // pred_check_branch
              %303 = sbr.rel target = $region56
            $region55: #{sab_forward.3} parent=47 // pred_region
              %s305 = ssub.s32 256, 1
              loop: start=0, step=1, limit=1
              $region57: #{sab_forward.3} parent=55 // loop_pre_header
                _
              $region58: #{sab_forward.3} parent=55 // loop_header
                %s307 = sphi 0, %s311
                %p308 = scmp.ge.s32.totalorder %s307, 1
                %s312 = sphi %s297, %s297
                %s313 = sphi %s293, %s293
              $region59: #{sab_forward.3} parent=55 // loop_header_branch
                %310 = sbr.rel (%p308) target = $region63
              $region60: #{sab_forward.3} parent=55 // loop_body
                %v314 = vld [vmem:[%s312] sm:%s305]
                %315 = vst [vmem:[%s313] sm:%s305] %v314
                %v316 = vld [vmem:[%s312 + $0x10] sm:%s305]
                %317 = vst [vmem:[%s313 + $0x8] sm:%s305] %v316
              $region61: #{sab_forward.3} parent=55 // loop_footer
                %s311 = sadd.s32 1, %s307
              $region62: #{sab_forward.3} parent=55 // loop_footer_branch
                %306 = sbr.rel target = $region58
              $region63: #{sab_forward.3} parent=55 // loop_exit
                _
            $region56: #{sab_forward.3} parent=47 // pred_fallthru
              _
          $region48: #{sab_forward.3} parent=43 // pred_fallthru
            _
          %334 = vnop
        $region44: #{sab_forward.3} parent=27 // pred_fallthru
          _
      $region28: #{sab_forward.3} parent=5 // pred_fallthru
        _
      %p335 = scmp.le.s32.totalorder 1, %s14
      %p336 = scmp.lt.s32.totalorder %s14, 9
      %p337 = pnand %p335, %p336
      %p338 = pneg %p337
      // Predicated region
      $region79: #{sab_forward.3} parent=5 // pred_check
        _
      $region80: #{sab_forward.3} parent=5 // pred_check_branch
        %340 = sbr.rel (%p337) target = $region82
      $region81: #{sab_forward.3} parent=5 // pred_region
        %s341 = ssub.s32 %s14, 1
        %s342 = sand.u32 %s149, 1
        %s343 = sand.u32 %s149, 1
        %s344 = smul.addr %s343, 16
        %s345 = scalar_lea.vmem [#allocation6], %s344
        // Predicated region
        $region83: #{sab_forward.3} parent=81 // pred_check
          %p346 = pneg %p162
        $region84: #{sab_forward.3} parent=81 // pred_check_branch
          %348 = sbr.rel (%p346) target = $region86
        $region85: #{sab_forward.3} parent=81 // pred_region
          _
        $region86: #{sab_forward.3} parent=81 // pred_fallthru
          _
        %p349 = pneg %p54
        %p350 = pneg %p51
        %p351 = scmp.lt.s32.totalorder %s24, 1
        %s352 = scalar_select %p351, %s24, 1
        %p353 = scmp.lt.s32.totalorder %s25, 1
        %s354 = scalar_select %p353, %s25, 1
        %s355 = smul.addr %s352, 2
        %s356 = sadd.s32 %s354, %s355
        %s357 = smul.addr %s356, 2
        %s358 = scalar_lea.vmem %s1, %s357
        %p359 = pneg %p82
        %p360 = pneg %p79
        %p361 = scmp.lt.s32.totalorder %s24, 1
        %s362 = scalar_select %p361, %s24, 1
        %s363 = smul.addr %s362, 2
        %s364 = smul.addr %s363, 2
        %s365 = scalar_lea.vmem %s2, %s364
        %p366 = pneg %p108
        %p367 = pneg %p105
        %p368 = scmp.lt.s32.totalorder %s24, 1
        %s369 = scalar_select %p368, %s24, 1
        %s370 = smul.addr %s369, 4
        %s371 = smul.addr %s370, 8
        %s372 = scalar_lea.vmem %s3, %s371
        %p373 = pneg %p134
        %p374 = pneg %p131
        %s375 = sand.u32 %s149, 1
        %s376 = sand.u32 %s149, 1
        %s377 = smul.addr %s376, 16
        %s378 = scalar_lea.vmem [#allocation6], %s377
        %p379 = pneg %p162
        %p380 = pneg %p159
        %p381 = pneg %p183
        %p382 = pneg %p180
        %p383 = pneg %p204
        %p384 = pneg %p201
        %p385 = pneg %p232
        %p386 = pneg %p229
        %s387 = sand.u32 %s219, 1
        %s388 = sand.u32 %s219, 1
        %s389 = smul.addr %s388, 16
        %s390 = scalar_lea.vmem [#allocation7], %s389
        %p391 = scmp.lt.s32.totalorder %s24, 1
        %s392 = scalar_select %p391, %s24, 1
        %p393 = scmp.lt.s32.totalorder %s25, 1
        %s394 = scalar_select %p393, %s25, 1
        %s395 = smul.addr %s392, 2
        %s396 = sadd.s32 %s394, %s395
        %s397 = smul.addr %s396, 2
        %s398 = scalar_lea.vmem %s1, %s397
        %p399 = scmp.lt.s32.totalorder %s24, 1
        %s400 = scalar_select %p399, %s24, 1
        %s401 = smul.addr %s400, 2
        %s402 = smul.addr %s401, 2
        %s403 = scalar_lea.vmem %s2, %s402
        %p404 = scmp.lt.s32.totalorder %s24, 1
        %s405 = scalar_select %p404, %s24, 1
        %s406 = smul.addr %s405, 4
        %s407 = smul.addr %s406, 8
        %s408 = scalar_lea.vmem %s3, %s407
        %p410 = scmp.eq.s32.totalorder %s26, 0
        // Predicated region
        $region87: #{sab_forward.3} parent=81 // pred_check
          %p411 = pneg %p410
        $region88: #{sab_forward.3} parent=81 // pred_check_branch
          %413 = sbr.rel (%p411) target = $region90
        $region89: #{sab_forward.3} parent=81 // pred_region
          %414 = vst [vmem:[#allocation3] sm:$0x1] -inf
          %415 = vst [vmem:[#allocation4] sm:$0x1] 0.0
          %416 = vst [vmem:[#allocation2] sm:$0xff] 0.0
          %417 = vst [vmem:[#allocation2 + $0x8] sm:$0xff] 0.0
        $region90: #{sab_forward.3} parent=81 // pred_fallthru
          _
        %v418 = vld [vmem:[%s398] sm:$0x3]
        %s419 = smul.u32 %s26, 128
        %s420 = sshra.s32 %s419, 7
        %s421 = sand.u32 %s419, 127
        %s422 = smul.addr %s420, 2
        %s423 = scalar_lea.vmem %s403, %s422
        %v424 = vld [vmem:[%s423] sm:$0x3]
        %s425 = smul.addr %s420, 8
        %s426 = scalar_lea.vmem %s408, %s425
        %v427 = vld [vmem:[%s426] sm:$0xff]
        %v428 = vld [vmem:[%s426 + $0x10] sm:$0xff]
        %429 = vxpose.xlu0.b32.start [1/16] %v424, 128
        %430 = vxpose.xlu0.b32.cont [2/16] 0.0, 128
        %431 = vxpose.xlu0.b32.cont [3/16] 0.0, 128
        %432 = vxpose.xlu0.b32.cont [4/16] 0.0, 128
        %433 = vxpose.xlu0.b32.cont [5/16] 0.0, 128
        %434 = vxpose.xlu0.b32.cont [6/16] 0.0, 128
        %435 = vxpose.xlu0.b32.cont [7/16] 0.0, 128
        %436 = vxpose.xlu0.b32.cont [8/16] 0.0, 128
        %437 = vxpose.xlu0.b32.cont [9/16] 0.0, 128
        %438 = vxpose.xlu0.b32.cont [10/16] 0.0, 128
        %439 = vxpose.xlu0.b32.cont [11/16] 0.0, 128
        %440 = vxpose.xlu0.b32.cont [12/16] 0.0, 128
        %441 = vxpose.xlu0.b32.cont [13/16] 0.0, 128
        %442 = vxpose.xlu0.b32.cont [14/16] 0.0, 128
        %443 = vxpose.xlu0.b32.cont [15/16] 0.0, 128
        %444 = vxpose.xlu0.b32.end [16/16] 0.0, 128
        %v445 = vpop.trf.xlu0
        %v446 = vpop.trf.xlu0
        %v447 = vpop.trf.xlu0
        %v448 = vpop.trf.xlu0
        %v449 = vpop.trf.xlu0
        %v450 = vpop.trf.xlu0
        %v451 = vpop.trf.xlu0
        %v452 = vpop.trf.xlu0
        %v453 = vpop.trf.xlu0
        %v454 = vpop.trf.xlu0
        %v455 = vpop.trf.xlu0
        %v456 = vpop.trf.xlu0
        %v457 = vpop.trf.xlu0
        %v458 = vpop.trf.xlu0
        %v459 = vpop.trf.xlu0
        %v460 = vpop.trf.xlu0
        %vm461 = vcmask 15360
        %v463 = vsel %vm461, %v445, 0
        %v466 = vsel %vm461, %v446, 0
        %v469 = vsel %vm461, %v447, 0
        %v472 = vsel %vm461, %v448, 0
        %v475 = vsel %vm461, %v449, 0
        %v478 = vsel %vm461, %v450, 0
        %v481 = vsel %vm461, %v451, 0
        %v484 = vsel %vm461, %v452, 0
        %v487 = vsel %vm461, %v453, 0
        %v490 = vsel %vm461, %v454, 0
        %v493 = vsel %vm461, %v455, 0
        %v496 = vsel %vm461, %v456, 0
        %v499 = vsel %vm461, %v457, 0
        %v502 = vsel %vm461, %v458, 0
        %v505 = vsel %vm461, %v459, 0
        %v508 = vsel %vm461, %v460, 0
        %vm510 = vcmask 1041408
        %v512 = vsel %vm510, %v418, 0
        %514 = vmatprep.subr.mxu0 0.0
        %515 = vmatpush1.msra.mxu0 0.0
        %516 = vmatprep.subr.mxu0 0.0
        %517 = vmatpush1.msra.mxu0 0.0
        %518 = vmatprep.subr.mxu0 0.0
        %519 = vmatpush1.msra.mxu0 0.0
        %520 = vmatprep.subr.mxu0 0.0
        %521 = vmatpush1.msra.mxu0 0.0
        %522 = vmatprep.subr.mxu0 0.0
        %523 = vmatpush1.msra.mxu0 0.0
        %524 = vmatprep.subr.mxu0 0.0
        %525 = vmatpush1.msra.mxu0 0.0
        %526 = vmatprep.subr.mxu0 0.0
        %527 = vmatpush1.msra.mxu0 0.0
        %528 = vmatprep.subr.mxu0 0.0
        %529 = vmatpush1.msra.mxu0 0.0
        %530 = vmatprep.subr.mxu0 0.0
        %531 = vmatpush1.msra.mxu0 0.0
        %532 = vmatprep.subr.mxu0 0.0
        %533 = vmatpush1.msra.mxu0 0.0
        %534 = vmatprep.subr.mxu0 0.0
        %535 = vmatpush1.msra.mxu0 0.0
        %536 = vmatprep.subr.mxu0 0.0
        %537 = vmatpush1.msra.mxu0 0.0
        %538 = vmatprep.subr.mxu0 0.0
        %539 = vmatpush1.msra.mxu0 0.0
        %540 = vmatprep.subr.mxu0 0.0
        %541 = vmatpush1.msra.mxu0 0.0
        %542 = vmatprep.subr.mxu0 0.0
        %543 = vmatpush1.msra.mxu0 0.0
        %544 = vmatprep.subr.mxu0 0.0
        %545 = vmatpush1.msra.mxu0 %v512
        %546 = vmatprep.subr.mxu0 0.0
        %547 = vmatpush2.msra.mxu0 0.0
        %548 = vmatprep.subr.mxu0 0.0
        %549 = vmatpush2.msra.mxu0 0.0
        %550 = vmatprep.subr.mxu0 0.0
        %551 = vmatpush2.msra.mxu0 0.0
        %552 = vmatprep.subr.mxu0 0.0
        %553 = vmatpush2.msra.mxu0 0.0
        %554 = vmatprep.subr.mxu0 0.0
        %555 = vmatpush2.msra.mxu0 0.0
        %556 = vmatprep.subr.mxu0 0.0
        %557 = vmatpush2.msra.mxu0 0.0
        %558 = vmatprep.subr.mxu0 0.0
        %559 = vmatpush2.msra.mxu0 0.0
        %560 = vmatprep.subr.mxu0 0.0
        %561 = vmatpush2.msra.mxu0 0.0
        %562 = vmatprep.subr.mxu0 0.0
        %563 = vmatpush2.msra.mxu0 0.0
        %564 = vmatprep.subr.mxu0 0.0
        %565 = vmatpush2.msra.mxu0 0.0
        %566 = vmatprep.subr.mxu0 0.0
        %567 = vmatpush2.msra.mxu0 0.0
        %568 = vmatprep.subr.mxu0 0.0
        %569 = vmatpush2.msra.mxu0 0.0
        %570 = vmatprep.subr.mxu0 0.0
        %571 = vmatpush2.msra.mxu0 0.0
        %572 = vmatprep.subr.mxu0 0.0
        %573 = vmatpush2.msra.mxu0 0.0
        %574 = vmatprep.subr.mxu0 0.0
        %575 = vmatpush2.msra.mxu0 0.0
        %576 = vmatprep.subr.mxu0 0.0
        %577 = vmatpush2.msra.mxu0 0.0
        %578 = vmatprep.mubr.f32.mxu0 0.0
        %579 = vmatmul.mubr.f32.gmra.mxu0 %v463
        %v580 = vpop.f32.mrf.mxu0
        %v581 = vadd.f32 0.0, %v580
        %v582 = vpop.f32.mrf.mxu0
        %583 = vmatprep.mubr.f32.mxu0 0.0
        %584 = vmatmul.mubr.f32.gmra.mxu0 %v466
        %v585 = vpop.f32.mrf.mxu0
        %v586 = vadd.f32 0.0, %v585
        %v587 = vpop.f32.mrf.mxu0
        %588 = vmatprep.mubr.f32.mxu0 0.0
        %589 = vmatmul.mubr.f32.gmra.mxu0 %v469
        %v590 = vpop.f32.mrf.mxu0
        %v591 = vadd.f32 0.0, %v590
        %v592 = vpop.f32.mrf.mxu0
        %593 = vmatprep.mubr.f32.mxu0 0.0
        %594 = vmatmul.mubr.f32.gmra.mxu0 %v472
        %v595 = vpop.f32.mrf.mxu0
        %v596 = vadd.f32 0.0, %v595
        %v597 = vpop.f32.mrf.mxu0
        %598 = vmatprep.mubr.f32.mxu0 0.0
        %599 = vmatmul.mubr.f32.gmra.mxu0 %v475
        %v600 = vpop.f32.mrf.mxu0
        %v601 = vadd.f32 0.0, %v600
        %v602 = vpop.f32.mrf.mxu0
        %603 = vmatprep.mubr.f32.mxu0 0.0
        %604 = vmatmul.mubr.f32.gmra.mxu0 %v478
        %v605 = vpop.f32.mrf.mxu0
        %v606 = vadd.f32 0.0, %v605
        %v607 = vpop.f32.mrf.mxu0
        %608 = vmatprep.mubr.f32.mxu0 0.0
        %609 = vmatmul.mubr.f32.gmra.mxu0 %v481
        %v610 = vpop.f32.mrf.mxu0
        %v611 = vadd.f32 0.0, %v610
        %v612 = vpop.f32.mrf.mxu0
        %613 = vmatprep.mubr.f32.mxu0 0.0
        %614 = vmatmul.mubr.f32.gmra.mxu0 %v484
        %v615 = vpop.f32.mrf.mxu0
        %v616 = vadd.f32 0.0, %v615
        %v617 = vpop.f32.mrf.mxu0
        %618 = vmatprep.mubr.f32.mxu0 0.0
        %619 = vmatmul.mubr.f32.gmra.mxu0 %v487
        %v620 = vpop.f32.mrf.mxu0
        %v621 = vadd.f32 0.0, %v620
        %v622 = vpop.f32.mrf.mxu0
        %623 = vmatprep.mubr.f32.mxu0 0.0
        %624 = vmatmul.mubr.f32.gmra.mxu0 %v490
        %v625 = vpop.f32.mrf.mxu0
        %v626 = vadd.f32 0.0, %v625
        %v627 = vpop.f32.mrf.mxu0
        %628 = vmatprep.mubr.f32.mxu0 0.0
        %629 = vmatmul.mubr.f32.gmra.mxu0 %v493
        %v630 = vpop.f32.mrf.mxu0
        %v631 = vadd.f32 0.0, %v630
        %v632 = vpop.f32.mrf.mxu0
        %633 = vmatprep.mubr.f32.mxu0 0.0
        %634 = vmatmul.mubr.f32.gmra.mxu0 %v496
        %v635 = vpop.f32.mrf.mxu0
        %v636 = vadd.f32 0.0, %v635
        %v637 = vpop.f32.mrf.mxu0
        %638 = vmatprep.mubr.f32.mxu0 0.0
        %639 = vmatmul.mubr.f32.gmra.mxu0 %v499
        %v640 = vpop.f32.mrf.mxu0
        %v641 = vadd.f32 0.0, %v640
        %v642 = vpop.f32.mrf.mxu0
        %643 = vmatprep.mubr.f32.mxu0 0.0
        %644 = vmatmul.mubr.f32.gmra.mxu0 %v502
        %v645 = vpop.f32.mrf.mxu0
        %v646 = vadd.f32 0.0, %v645
        %v647 = vpop.f32.mrf.mxu0
        %648 = vmatprep.mubr.f32.mxu0 0.0
        %649 = vmatmul.mubr.f32.gmra.mxu0 %v505
        %v650 = vpop.f32.mrf.mxu0
        %v651 = vadd.f32 0.0, %v650
        %v652 = vpop.f32.mrf.mxu0
        %653 = vmatprep.mubr.f32.mxu0 0.0
        %654 = vmatmul.mubr.f32.gmra.mxu0 %v508
        %v655 = vpop.f32.mrf.mxu0
        %v656 = vadd.f32 0.0, %v655
        %v657 = vpop.f32.mrf.mxu0
        %658 = vdwg.mxu0
        %v659 = vld [vmem:[#allocation3] sm:$0x1]
        %v660 = vmax.f32 %v581, %v601
        %v661 = vmax.f32 %v586, %v606
        %v662 = vmax.f32 %v591, %v611
        %v663 = vmax.f32 %v596, %v616
        %v664 = vmax.f32 %v660, %v621
        %v665 = vmax.f32 %v661, %v626
        %v666 = vmax.f32 %v662, %v631
        %v667 = vmax.f32 %v663, %v636
        %v668 = vmax.f32 %v664, %v641
        %v669 = vmax.f32 %v665, %v646
        %v670 = vmax.f32 %v666, %v651
        %v671 = vmax.f32 %v667, %v656
        %v672 = vmax.f32 %v668, %v669
        %v673 = vmax.f32 %v670, %v671
        %v674 = vmax.f32 %v672, %v673
        %v675 = vrot.slane %v674, 4
        %v676 = vmax.f32 %v674, %v675
        %v677 = vrot.slane %v676, 2
        %v678 = vmax.f32 %v676, %v677
        %v679 = vrot.slane %v678, 1
        %v680 = vmax.f32 %v678, %v679
        %v681 = vmax.f32 %v659, %v680
        %v682 = vsub.f32 %v659, %v681
        %v683 = vmul.f32 %v682, 1.442695
        %v684 = vpow.pop %v683
        %v686 = vlaneseq
        %v687 = vshrl.u32 %v686, 7
        %v688 = vsub.s32 0, %v687
        %v689 = vrot.slane %v681, %v688
        %v691 = vsub.f32 %v581, %v689
        %v692 = vsub.f32 %v586, %v689
        %v693 = vsub.f32 %v591, %v689
        %v694 = vsub.f32 %v596, %v689
        %v695 = vsub.f32 %v601, %v689
        %v696 = vsub.f32 %v606, %v689
        %v697 = vsub.f32 %v611, %v689
        %v698 = vsub.f32 %v616, %v689
        %v699 = vsub.f32 %v621, %v689
        %v700 = vsub.f32 %v626, %v689
        %v701 = vsub.f32 %v631, %v689
        %v702 = vsub.f32 %v636, %v689
        %v703 = vsub.f32 %v641, %v689
        %v704 = vsub.f32 %v646, %v689
        %v705 = vsub.f32 %v651, %v689
        %v706 = vsub.f32 %v656, %v689
        %v707 = vmul.f32 %v691, 1.442695
        %v708 = vpow.pop %v707
        %v709 = vmul.f32 %v692, 1.442695
        %v710 = vpow.pop %v709
        %v711 = vmul.f32 %v693, 1.442695
        %v712 = vpow.pop %v711
        %v713 = vmul.f32 %v694, 1.442695
        %v714 = vpow.pop %v713
        %v715 = vmul.f32 %v695, 1.442695
        %v716 = vpow.pop %v715
        %v717 = vmul.f32 %v696, 1.442695
        %v718 = vpow.pop %v717
        %v719 = vmul.f32 %v697, 1.442695
        %v720 = vpow.pop %v719
        %v721 = vmul.f32 %v698, 1.442695
        %v722 = vpow.pop %v721
        %v723 = vmul.f32 %v699, 1.442695
        %v724 = vpow.pop %v723
        %v725 = vmul.f32 %v700, 1.442695
        %v726 = vpow.pop %v725
        %v727 = vmul.f32 %v701, 1.442695
        %v728 = vpow.pop %v727
        %v729 = vmul.f32 %v702, 1.442695
        %v730 = vpow.pop %v729
        %v731 = vmul.f32 %v703, 1.442695
        %v732 = vpow.pop %v731
        %v733 = vmul.f32 %v704, 1.442695
        %v734 = vpow.pop %v733
        %v735 = vmul.f32 %v705, 1.442695
        %v736 = vpow.pop %v735
        %v737 = vmul.f32 %v706, 1.442695
        %v738 = vpow.pop %v737
        %v739 = vld [vmem:[#allocation4] sm:$0x1]
        %v740 = vmul.f32 %v684, %v739
        %v741 = vadd.f32 %v708, %v710
        %v742 = vadd.f32 %v741, %v712
        %v743 = vadd.f32 %v742, %v714
        %v744 = vadd.f32 %v743, %v716
        %v745 = vadd.f32 %v744, %v718
        %v746 = vadd.f32 %v745, %v720
        %v747 = vadd.f32 %v746, %v722
        %v748 = vadd.f32 %v747, %v724
        %v749 = vadd.f32 %v748, %v726
        %v750 = vadd.f32 %v749, %v728
        %v751 = vadd.f32 %v750, %v730
        %v752 = vadd.f32 %v751, %v732
        %v753 = vadd.f32 %v752, %v734
        %v754 = vadd.f32 %v753, %v736
        %v755 = vadd.f32 %v754, %v738
        %v756 = vrot.slane %v755, 4
        %v757 = vadd.f32 %v755, %v756
        %v758 = vrot.slane %v757, 2
        %v759 = vadd.f32 %v757, %v758
        %v760 = vrot.slane %v759, 1
        %v761 = vadd.f32 %v759, %v760
        %v762 = vadd.f32 %v740, %v761
        %763 = vst [vmem:[#allocation4] sm:$0x1] %v762
        %v764 = vld [vmem:[#allocation2] sm:$0xff]
        %v765 = vld [vmem:[#allocation2 + $0x8] sm:$0xff]
        %v767 = vlaneseq
        %v768 = vshrl.u32 %v767, 7
        %v769 = vsub.s32 0, %v768
        %v770 = vrot.slane %v684, %v769
        %v772 = vmul.f32 %v770, %v764
        %v773 = vmul.f32 %v770, %v765
        %v774 = vpack.c.bf16 %v428, %v427
        %v775 = vpack.c.bf16 %v710, %v708
        %v776 = vpack.c.bf16 %v714, %v712
        %v777 = vpack.c.bf16 %v718, %v716
        %v778 = vpack.c.bf16 %v722, %v720
        %v779 = vpack.c.bf16 %v726, %v724
        %v780 = vpack.c.bf16 %v730, %v728
        %v781 = vpack.c.bf16 %v734, %v732
        %v782 = vpack.c.bf16 %v738, %v736
        %783 = vmatprep.subr.bf16.mxu0 0
        %784 = vmatpush1.bf16.msra.mxu0 %v782
        %785 = vmatprep.subr.bf16.mxu0 0
        %786 = vmatpush1.bf16.msra.mxu0 %v781
        %787 = vmatprep.subr.bf16.mxu0 0
        %788 = vmatpush1.bf16.msra.mxu0 %v780
        %789 = vmatprep.subr.bf16.mxu0 0
        %790 = vmatpush1.bf16.msra.mxu0 %v779
        %791 = vmatprep.subr.bf16.mxu0 0
        %792 = vmatpush1.bf16.msra.mxu0 %v778
        %793 = vmatprep.subr.bf16.mxu0 0
        %794 = vmatpush1.bf16.msra.mxu0 %v777
        %795 = vmatprep.subr.bf16.mxu0 0
        %796 = vmatpush1.bf16.msra.mxu0 %v776
        %797 = vmatprep.subr.bf16.mxu0 0
        %798 = vmatpush1.bf16.msra.mxu0 %v775
        %799 = vmatprep.subr.bf16.mxu0 0
        %800 = vmatpush2.bf16.msra.mxu0 0
        %801 = vmatprep.subr.bf16.mxu0 0
        %802 = vmatpush2.bf16.msra.mxu0 0
        %803 = vmatprep.subr.bf16.mxu0 0
        %804 = vmatpush2.bf16.msra.mxu0 0
        %805 = vmatprep.subr.bf16.mxu0 0
        %806 = vmatpush2.bf16.msra.mxu0 0
        %807 = vmatprep.subr.bf16.mxu0 0
        %808 = vmatpush2.bf16.msra.mxu0 0
        %809 = vmatprep.subr.bf16.mxu0 0
        %810 = vmatpush2.bf16.msra.mxu0 0
        %811 = vmatprep.subr.bf16.mxu0 0
        %812 = vmatpush2.bf16.msra.mxu0 0
        %813 = vmatprep.subr.bf16.mxu0 0
        %814 = vmatpush2.bf16.msra.mxu0 0
        %815 = vmatprep.mubr.bf16.mxu0 0
        %816 = vmatmul.mubr.bf16.gmra.mxu0 %v774
        %v817 = vpop.f32.mrf.mxu0
        %v818 = vadd.f32 0.0, %v817
        %v819 = vpop.f32.mrf.mxu0
        %v820 = vpop.f32.mrf.mxu0
        %v821 = vadd.f32 0.0, %v820
        %v822 = vpop.f32.mrf.mxu0
        %823 = vdwg.mxu0
        %v824 = vadd.f32 %v772, %v818
        %v825 = vadd.f32 %v773, %v821
        %826 = vst [vmem:[#allocation2] sm:$0xff] %v824
        %827 = vst [vmem:[#allocation2 + $0x8] sm:$0xff] %v825
        %828 = vst [vmem:[#allocation3] sm:$0x1] %v681
        %p829 = scmp.eq.s32.totalorder %s26, 1
        // Predicated region
        $region91: #{sab_forward.3} parent=81 // pred_check
          %p830 = pneg %p829
        $region92: #{sab_forward.3} parent=81 // pred_check_branch
          %832 = sbr.rel (%p830) target = $region94
        $region93: #{sab_forward.3} parent=81 // pred_region
          %v833 = vld [vmem:[#allocation4] sm:$0x1]
          %v834 = vrcp.pop %v833
          %v835 = vld [vmem:[#allocation2] sm:$0xff]
          %v836 = vld [vmem:[#allocation2 + $0x8] sm:$0xff]
          %v838 = vlaneseq
          %v839 = vshrl.u32 %v838, 7
          %v840 = vsub.s32 0, %v839
          %v841 = vrot.slane %v834, %v840
          %v843 = vmul.f32 %v835, %v841
          %v844 = vmul.f32 %v836, %v841
          %v845 = vld [vmem:[%s5] sm:$0xff]
          %v846 = vld [vmem:[%s5 + $0x8] sm:$0xff]
          %v847 = vld [vmem:[%s6] sm:$0xff]
          %v848 = vld [vmem:[%s6 + $0x8] sm:$0xff]
          %850 = vset.pattern.permute.xlu0 0
          %851 = vperm.xlu0 %850, %v847
          %v852 = vpop.permute.xlu0 %851
          %855 = vset.pattern.permute.xlu0 0
          %856 = vperm.xlu0 %855, %v848
          %v857 = vpop.permute.xlu0 %856
          %vm859 = vcmask 130048
          %v861 = vsel %vm859, %v845, 0
          %v864 = vsel %vm859, %v846, 0
          %866 = vmatprep.subr.mxu0 0.0
          %867 = vmatpush1.msra.mxu0 0.0
          %868 = vmatprep.subr.mxu0 0.0
          %869 = vmatpush1.msra.mxu0 0.0
          %870 = vmatprep.subr.mxu0 0.0
          %871 = vmatpush1.msra.mxu0 0.0
          %872 = vmatprep.subr.mxu0 0.0
          %873 = vmatpush1.msra.mxu0 0.0
          %874 = vmatprep.subr.mxu0 0.0
          %875 = vmatpush1.msra.mxu0 0.0
          %876 = vmatprep.subr.mxu0 0.0
          %877 = vmatpush1.msra.mxu0 0.0
          %878 = vmatprep.subr.mxu0 0.0
          %879 = vmatpush1.msra.mxu0 0.0
          %880 = vmatprep.subr.mxu0 0.0
          %881 = vmatpush1.msra.mxu0 0.0
          %882 = vmatprep.subr.mxu0 0.0
          %883 = vmatpush1.msra.mxu0 0.0
          %884 = vmatprep.subr.mxu0 0.0
          %885 = vmatpush1.msra.mxu0 0.0
          %886 = vmatprep.subr.mxu0 0.0
          %887 = vmatpush1.msra.mxu0 0.0
          %888 = vmatprep.subr.mxu0 0.0
          %889 = vmatpush1.msra.mxu0 0.0
          %890 = vmatprep.subr.mxu0 0.0
          %891 = vmatpush1.msra.mxu0 0.0
          %892 = vmatprep.subr.mxu0 0.0
          %893 = vmatpush1.msra.mxu0 0.0
          %894 = vmatprep.subr.mxu0 0.0
          %895 = vmatpush1.msra.mxu0 %v844
          %896 = vmatprep.subr.mxu0 0.0
          %897 = vmatpush1.msra.mxu0 %v843
          %898 = vmatprep.subr.mxu0 0.0
          %899 = vmatpush2.msra.mxu0 0.0
          %900 = vmatprep.subr.mxu0 0.0
          %901 = vmatpush2.msra.mxu0 0.0
          %902 = vmatprep.subr.mxu0 0.0
          %903 = vmatpush2.msra.mxu0 0.0
          %904 = vmatprep.subr.mxu0 0.0
          %905 = vmatpush2.msra.mxu0 0.0
          %906 = vmatprep.subr.mxu0 0.0
          %907 = vmatpush2.msra.mxu0 0.0
          %908 = vmatprep.subr.mxu0 0.0
          %909 = vmatpush2.msra.mxu0 0.0
          %910 = vmatprep.subr.mxu0 0.0
          %911 = vmatpush2.msra.mxu0 0.0
          %912 = vmatprep.subr.mxu0 0.0
          %913 = vmatpush2.msra.mxu0 0.0
          %914 = vmatprep.subr.mxu0 0.0
          %915 = vmatpush2.msra.mxu0 0.0
          %916 = vmatprep.subr.mxu0 0.0
          %917 = vmatpush2.msra.mxu0 0.0
          %918 = vmatprep.subr.mxu0 0.0
          %919 = vmatpush2.msra.mxu0 0.0
          %920 = vmatprep.subr.mxu0 0.0
          %921 = vmatpush2.msra.mxu0 0.0
          %922 = vmatprep.subr.mxu0 0.0
          %923 = vmatpush2.msra.mxu0 0.0
          %924 = vmatprep.subr.mxu0 0.0
          %925 = vmatpush2.msra.mxu0 0.0
          %926 = vmatprep.subr.mxu0 0.0
          %927 = vmatpush2.msra.mxu0 0.0
          %928 = vmatprep.subr.mxu0 0.0
          %929 = vmatpush2.msra.mxu0 0.0
          %930 = vmatprep.mubr.f32.mxu0 0.0
          %931 = vmatmul.mubr.f32.gmra.mxu0 %v861
          %v932 = vpop.f32.mrf.mxu0
          %v933 = vadd.f32 %v852, %v932
          %v934 = vpop.f32.mrf.mxu0
          %935 = vmatprep.mubr.f32.mxu0 0.0
          %936 = vmatmul.mubr.f32.gmra.mxu0 %v864
          %v937 = vpop.f32.mrf.mxu0
          %v938 = vadd.f32 %v857, %v937
          %v939 = vpop.f32.mrf.mxu0
          %940 = vdwg.mxu0
          %s941 = sld [smem:[#allocation5]]
          %v942 = vstv %s941
          %v943 = vmul.f32 %v942, %v933
          %v944 = vmul.f32 %v942, %v938
          %v945 = vld [vmem:[%s345] sm:$0xff]
          %v946 = vld [vmem:[%s345 + $0x8] sm:$0xff]
          %v947 = vadd.f32 %v943, %v945
          %v948 = vadd.f32 %v944, %v946
          %949 = vst [vmem:[%s390] sm:$0xff] %v947
          %950 = vst [vmem:[%s390 + $0x8] sm:$0xff] %v948
        $region94: #{sab_forward.3} parent=81 // pred_fallthru
          _
        %s951 = sand.u32 %s219, 1
        %s952 = sand.u32 %s219, 1
        %s953 = smul.addr %s952, 16
        %s954 = scalar_lea.vmem [#allocation7], %s953
        // Predicated region
        $region95: #{sab_forward.3} parent=81 // pred_check
          %p955 = pneg %p229
        $region96: #{sab_forward.3} parent=81 // pred_check_branch
          %957 = sbr.rel (%p955) target = $region98
        $region97: #{sab_forward.3} parent=81 // pred_region
          %s958 = smul.addr %s24, 4
          %s959 = sadd.s32 %s25, %s958
          %s960 = smul.addr %s959, 8
          %s961 = scalar_lea.vmem %s7, %s960
          // Predicated region
          $region99: #{sab_forward.3} parent=97 // pred_check
            _
          $region100: #{sab_forward.3} parent=97 // pred_check_branch
            %963 = sbr.rel (0) target = $region102
          $region101: #{sab_forward.3} parent=97 // pred_region
            // Predicated region
            $region103: #{sab_forward.3} parent=101 // pred_check
              _
            $region104: #{sab_forward.3} parent=101 // pred_check_branch
              %965 = sbr.rel (0) target = $region106
            $region105: #{sab_forward.3} parent=101 // pred_region
              // Predicated region
              $region118: #{sab_forward.3} parent=105 // pred_check
                _
              $region119: #{sab_forward.3} parent=105 // pred_check_branch
                %983 = sbr.rel (0) target = $region121
              $region120: #{sab_forward.3} parent=105 // pred_region
                loop: start=0, step=1, limit=1
                $region122: #{sab_forward.3} parent=120 // loop_pre_header
                  _
                $region123: #{sab_forward.3} parent=120 // loop_header
                  %s985 = sphi 0, %s989
                  %p986 = scmp.ge.s32.totalorder %s985, 1
                  %s990 = sphi %s954, %s954
                  %s991 = sphi %s961, %s961
                $region124: #{sab_forward.3} parent=120 // loop_header_branch
                  %988 = sbr.rel (%p986) target = $region128
                $region125: #{sab_forward.3} parent=120 // loop_body
                  %v992 = vld [vmem:[%s990] sm:$0xff]
                  %993 = vst [vmem:[%s991] sm:$0xff] %v992
                  %v994 = vld [vmem:[%s990 + $0x8] sm:$0xff]
                  %995 = vst [vmem:[%s991 + $0x10] sm:$0xff] %v994
                $region126: #{sab_forward.3} parent=120 // loop_footer
                  %s989 = sadd.s32 1, %s985
                $region127: #{sab_forward.3} parent=120 // loop_footer_branch
                  %984 = sbr.rel target = $region123
                $region128: #{sab_forward.3} parent=120 // loop_exit
                  _
              $region121: #{sab_forward.3} parent=105 // pred_fallthru
                _
              // Predicated region
              $region129: #{sab_forward.3} parent=105 // pred_check
                _
              $region130: #{sab_forward.3} parent=105 // pred_check_branch
                %997 = sbr.rel target = $region132
              $region131: #{sab_forward.3} parent=105 // pred_region
                _
              $region132: #{sab_forward.3} parent=105 // pred_fallthru
                _
            $region106: #{sab_forward.3} parent=101 // pred_fallthru
              _
            // Predicated region
            $region107: #{sab_forward.3} parent=101 // pred_check
              _
            $region108: #{sab_forward.3} parent=101 // pred_check_branch
              %967 = sbr.rel target = $region110
            $region109: #{sab_forward.3} parent=101 // pred_region
              %s969 = ssub.s32 256, 1
              loop: start=0, step=1, limit=1
              $region111: #{sab_forward.3} parent=109 // loop_pre_header
                _
              $region112: #{sab_forward.3} parent=109 // loop_header
                %s971 = sphi 0, %s975
                %p972 = scmp.ge.s32.totalorder %s971, 1
                %s976 = sphi %s954, %s954
                %s977 = sphi %s961, %s961
              $region113: #{sab_forward.3} parent=109 // loop_header_branch
                %974 = sbr.rel (%p972) target = $region117
              $region114: #{sab_forward.3} parent=109 // loop_body
                %v978 = vld [vmem:[%s976] sm:%s969]
                %979 = vst [vmem:[%s977] sm:%s969] %v978
                %v980 = vld [vmem:[%s976 + $0x8] sm:%s969]
                %981 = vst [vmem:[%s977 + $0x10] sm:%s969] %v980
              $region115: #{sab_forward.3} parent=109 // loop_footer
                %s975 = sadd.s32 1, %s971
              $region116: #{sab_forward.3} parent=109 // loop_footer_branch
                %970 = sbr.rel target = $region112
              $region117: #{sab_forward.3} parent=109 // loop_exit
                _
            $region110: #{sab_forward.3} parent=101 // pred_fallthru
              _
          $region102: #{sab_forward.3} parent=97 // pred_fallthru
            _
          %998 = vnop
        $region98: #{sab_forward.3} parent=81 // pred_fallthru
          _
      $region82: #{sab_forward.3} parent=5 // pred_fallthru
        _
      %p999 = scmp.le.s32.totalorder 2, %s14
      // Predicated region
      $region133: #{sab_forward.3} parent=5 // pred_check
        %p1000 = pneg %p999
      $region134: #{sab_forward.3} parent=5 // pred_check_branch
        %1002 = sbr.rel (%p1000) target = $region136
      $region135: #{sab_forward.3} parent=5 // pred_region
        %s1003 = ssub.s32 %s14, 2
        // Predicated region
        $region137: #{sab_forward.3} parent=135 // pred_check
          %p1004 = pneg %p235
        $region138: #{sab_forward.3} parent=135 // pred_check_branch
          %1006 = sbr.rel (%p1004) target = $region140
        $region139: #{sab_forward.3} parent=135 // pred_region
          %s1007 = sand.u32 %s220, 1
          %s1008 = sand.u32 %s220, 1
          %s1009 = smul.addr %s1008, 16
          %s1010 = scalar_lea.vmem [#allocation7], %s1009
        $region140: #{sab_forward.3} parent=135 // pred_fallthru
          _
      $region136: #{sab_forward.3} parent=5 // pred_fallthru
        _
    $region6: #{sab_forward.3} parent=1 // loop_footer
      %s18 = sadd.s32 1, %s14
    $region7: #{sab_forward.3} parent=1 // loop_footer_branch
      %13 = sbr.rel target = $region3
    $region8: #{sab_forward.3} parent=1 // loop_exit
      _

</llo_original>
